<compile_context>
chip_gen: v5e
topology: v5e:2x2
jax: 0.10.0
libtpu: 0.0.40
codegen_flags: <defaults>
</compile_context>

<pallas_src>
import math

import jax
import jax.numpy as jnp
from jax import lax
from jax.experimental import pallas as pl
from jax.experimental.pallas import tpu as pltpu

BN_EPS = 1e-5
LANE = 128


def _round_up(x, m):
    return (x + m - 1) // m * m


def _vmem_limit(nbytes):
    # Raise the scoped-VMEM limit enough for our blocks; stay within v7x's 64 MiB physical.
    return int(min(max(nbytes, 32 << 20), 64 << 20))


def unit_tcn_forward(x, weight, bias, gamma, beta, *, kernel_size=5, stride=1,
                     out_dtype=jnp.bfloat16):
    """unit_tcn forward: y = BatchNorm2d(Conv2d(x, (K,1), pad=(K//2,0), stride=(s,1))).

    x: (N, Cin, T, V) NCHW.  weight: (Cout, Cin, K, 1).  Returns (N, Cout, T_out, V).

    Notes:
      * `bias` is accepted for interface parity but unused: under training-mode BatchNorm
        the conv bias is exactly cancelled by the per-channel mean subtraction.
      * TODO(synk): BN running_mean / running_var buffers are not updated and eval-mode
        (running-stats) BN is not implemented; this is the training-mode forward only.
      * Pass 1 holds one full per-sample slab (T_out*V rows + temporal halo) in VMEM;
        for ST-GCN-sized layers this is ~1-4 MiB per buffer.
        TODO(synk): extremely long per-sample sequences (rows*Cin in the tens of MiB)
        would need intra-sample halo-DMA tiling instead of per-sample blocks.
    """
    del bias
    N, Cin, T, V = x.shape
    Cout = weight.shape[0]
    K = kernel_size
    pad = (K - 1) // 2
    T_out = (T + 2 * pad - K) // stride + 1

    MB = T_out * V                       # output rows per batch element
    M = N * MB                           # BN population size
    MB_p = _round_up(MB, LANE)           # lane-dense rows -> unmasked pass-2 stores
    Cinp = _round_up(Cin, LANE)
    Coutp = _round_up(Cout, LANE)

    # ---- single channels-last transpose + zero-pad of x (bf16) ----
    x_cl = jnp.zeros((N, T + 2 * pad, V, Cinp), jnp.bfloat16)
    x_cl = x_cl.at[:, pad:pad + T, :, :Cin].set(
        x.transpose(0, 2, 3, 1).astype(jnp.bfloat16))

    if stride == 1:
        # Fused halo layout: slab row (t*V + v) is x_pad[n, t, v, :]; tap k of output row
        # (t_out*V + v) lives at slab row (t_out*V + v) + k*V.
        row_step = V
        slab = x_cl.reshape(N, (T + 2 * pad) * V, Cinp)
    else:
        # TODO(synk): for stride > 1 the per-tap row offset is not constant, so fall back
        # to a K-expanded (but already channels-last, transpose-free) slab.
        row_step = MB
        taps = [
            lax.slice(x_cl, (0, k, 0, 0),
                      (N, k + stride * (T_out - 1) + 1, V, Cinp),
                      (1, stride, 1, 1)).reshape(N, MB, Cinp)
            for k in range(K)
        ]
        slab = jnp.concatenate(taps, axis=1)

    R = slab.shape[1]
    R_p = max(_round_up(R, 8), (K - 1) * row_step + MB_p)
    if R_p != R:
        slab = jnp.pad(slab, ((0, 0), (0, R_p - R), (0, 0)))

    # weight (Cout, Cin, K, 1) -> (K, Cin, Cout), zero-padded to (K, Cinp, Coutp).
    w = jnp.zeros((K, Cinp, Coutp), jnp.bfloat16)
    w = w.at[:, :Cin, :Cout].set(weight[..., 0].transpose(2, 1, 0).astype(jnp.bfloat16))

    # ---------- pass 1: fused unfold + conv matmul + per-sample BN partial stats ----------
    def conv_stats_kernel(x_ref, w_ref, conv_ref, stats_ref):
        # x_ref:    (1, R_p, Cinp)    bf16 per-sample slab (with temporal halo rows)
        # w_ref:    (K, Cinp, Coutp)  bf16 weights (resident across the grid)
        # conv_ref: (1, MB_p, Coutp)  bf16 conv output
        # stats_ref:(1, 2, Coutp)     f32 [sum, sum_sq] over this sample's valid rows
        acc = jnp.dot(x_ref[0, pl.ds(0, MB_p), :], w_ref[0],
                      preferred_element_type=jnp.float32)
        for k in range(1, K):
            acc = acc + jnp.dot(x_ref[0, pl.ds(k * row_step, MB_p), :], w_ref[k],
                                preferred_element_type=jnp.float32)
        if MB_p != MB:
            # Rows MB..MB_p only exist because of 128-row padding; they alias real slab
            # rows, so zero them before stats / store.
            ridx = lax.broadcasted_iota(jnp.int32, (MB_p, Coutp), 0)
            acc = jnp.where(ridx < MB, acc, 0.0)
        conv_ref[0] = acc.astype(conv_ref.dtype)
        s = jnp.sum(acc, axis=0, keepdims=True)            # (1, Coutp)
        ss = jnp.sum(acc * acc, axis=0, keepdims=True)      # (1, Coutp)
        stats_ref[0] = jnp.concatenate([s, ss], axis=0)

    need1 = (2 * R_p * Cinp * 2 + 2 * K * Cinp * Coutp * 2 + 2 * MB_p * Coutp * 2
             + 2 * 2 * Coutp * 4 + 2 * MB_p * Coutp * 4 + (4 << 20))
    conv, stats = pl.pallas_call(
        conv_stats_kernel,
        out_shape=(jax.ShapeDtypeStruct((N, MB_p, Coutp), jnp.bfloat16),
                   jax.ShapeDtypeStruct((N, 2, Coutp), jnp.float32)),
        grid=(N,),
        in_specs=[
            pl.BlockSpec((1, R_p, Cinp), lambda n: (n, 0, 0)),
            pl.BlockSpec((K, Cinp, Coutp), lambda n: (0, 0, 0)),
        ],
        out_specs=[
            pl.BlockSpec((1, MB_p, Coutp), lambda n: (n, 0, 0)),
            pl.BlockSpec((1, 2, Coutp), lambda n: (n, 0, 0)),
        ],
        compiler_params=pltpu.CompilerParams(
            dimension_semantics=("parallel",),
            vmem_limit_bytes=_vmem_limit(need1)),
    )(slab, w)

    # ---- tiny per-channel reduction + scale/shift fold (Coutp elements, plain JAX) ----
    # Naive E[x^2]-E[x]^2 in f32 from f32 partials; adequate unless |mean| >> spread.
    sums = jnp.sum(stats[:, 0, :], axis=0)
    sumsq = jnp.sum(stats[:, 1, :], axis=0)
    mean = sums / M
    var = jnp.maximum(sumsq / M - mean * mean, 0.0)
    inv_std = lax.rsqrt(var + BN_EPS)
    gamma_p = jnp.zeros((Coutp,), jnp.float32).at[:Cout].set(gamma.astype(jnp.float32))
    beta_p = jnp.zeros((Coutp,), jnp.float32).at[:Cout].set(beta.astype(jnp.float32))
    scale = (gamma_p * inv_std).reshape(1, Coutp)
    shift = (beta_p - mean * gamma_p * inv_std).reshape(1, Coutp)

    # ------ pass 2: apply folded BN + in-kernel transpose to the NCHW-ready layout ------
    def bn_apply_kernel(conv_ref, scale_ref, shift_ref, o_ref):
        y = conv_ref[0].astype(jnp.float32) * scale_ref[...] + shift_ref[...]
        o_ref[0] = y.T.astype(o_ref.dtype)      # (Coutp, MB_p): XLU transpose, free slot

    out_bytes = jnp.dtype(out_dtype).itemsize
    need2 = (2 * MB_p * Coutp * 2 + 2 * Coutp * MB_p * out_bytes
             + 2 * MB_p * Coutp * 4 + (4 << 20))
    out3 = pl.pallas_call(
        bn_apply_kernel,
        out_shape=jax.ShapeDtypeStruct((N, Coutp, MB_p), out_dtype),
        grid=(N,),
        in_specs=[
            pl.BlockSpec((1, MB_p, Coutp), lambda n: (n, 0, 0)),
            pl.BlockSpec((1, Coutp), lambda n: (0, 0)),
            pl.BlockSpec((1, Coutp), lambda n: (0, 0)),
        ],
        out_specs=pl.BlockSpec((1, Coutp, MB_p), lambda n: (n, 0, 0)),
        compiler_params=pltpu.CompilerParams(
            dimension_semantics=("parallel",),
            vmem_limit_bytes=_vmem_limit(need2)),
    )(conv, scale, shift)

    # (N, Coutp, MB_p) -> (N, Cout, T_out, V): slice padding + free reshape (no transpose).
    return out3[:, :Cout, :MB].reshape(N, Cout, T_out, V)


# ----------------------------- parameter initialization --------------------------------
def init_params(key, in_channels, out_channels, kernel_size=5):
    """Matches conv_init (kaiming_normal_ fan_out, bias=0) and bn_init(bn, 1)."""
    fan_out = out_channels * kernel_size * 1
    std = math.sqrt(2.0 / fan_out)
    weight = std * jax.random.normal(
        key, (out_channels, in_channels, kernel_size, 1), dtype=jnp.float32)
    bias = jnp.zeros((out_channels,), jnp.float32)
    gamma = jnp.ones((out_channels,), jnp.float32)   # bn_init(bn, 1)
    beta = jnp.zeros((out_channels,), jnp.float32)
    return weight, bias, gamma, beta


# --------------------------------- reference (JAX) --------------------------------------
def unit_tcn_reference(x, weight, bias, gamma, beta, *, kernel_size=5, stride=1):
    """f32 reference with the same bf16 rounding of conv operands as the kernel."""
    pad = (kernel_size - 1) // 2
    xf = x.astype(jnp.bfloat16).astype(jnp.float32)
    wf = weight.astype(jnp.bfloat16).astype(jnp.float32)
    conv = lax.conv_general_dilated(
        xf, wf, window_strides=(stride, 1), padding=((pad, pad), (0, 0)),
        dimension_numbers=("NCHW", "OIHW", "NCHW"))
    conv = conv + bias.reshape(1, -1, 1, 1)
    m = jnp.mean(conv, axis=(0, 2, 3), keepdims=True)
    v = jnp.mean((conv - m) ** 2, axis=(0, 2, 3), keepdims=True)
    return (conv - m) * lax.rsqrt(v + BN_EPS) * gamma.reshape(1, -1, 1, 1) \
        + beta.reshape(1, -1, 1, 1)


if __name__ == "__main__":
    key = jax.random.PRNGKey(0)

    # (N, Cin, T, V, Cout, K, stride):
    #   config 1 exercises the fused-halo stride-1 path,
    #   config 2 exercises the stride-2 fallback slab and the padded-row mask.
    configs = [(2, 4, 16, 16, 8, 5, 1),
               (2, 4, 12, 5, 8, 5, 2)]
    for N, Cin, T, V, Cout, K, stride in configs:
        k_x, k_p, key = jax.random.split(key, 3)
        x = jax.random.normal(k_x, (N, Cin, T, V), dtype=jnp.float32)
        weight, bias, gamma, beta = init_params(k_p, Cin, Cout, K)

        out = unit_tcn_forward(x, weight, bias, gamma, beta,
                               kernel_size=K, stride=stride)
        out = jax.block_until_ready(out)

        ref = unit_tcn_reference(x, weight, bias, gamma, beta,
                                 kernel_size=K, stride=stride)
        pad = (K - 1) // 2
        T_out = (T + 2 * pad - K) // stride + 1
        assert out.shape == (N, Cout, T_out, V), out.shape
        err = float(jnp.max(jnp.abs(out.astype(jnp.float32) - ref)))
        # bf16 conv intermediate + bf16 output -> worst-case ~2e-2 vs the f32 reference.
        assert err < 5e-2, (stride, err)

    print("KERNEL_OK")
</pallas_src>

<mosaic_0001>
module attributes {stable_mosaic.version = 11 : i64} {
  func.func @conv_stats_kernel(%arg0: i32, %arg1: memref<1x320x128xbf16, #tpu.memory_space<vmem>>, %arg2: memref<5x128x128xbf16, #tpu.memory_space<vmem>>, %arg3: memref<1x256x128xbf16, #tpu.memory_space<vmem>>, %arg4: memref<1x2x128xf32, #tpu.memory_space<vmem>>) attributes {dimension_semantics = [#tpu.dimension_semantics<parallel>], iteration_bounds = array<i64: 2>, scalar_prefetch = 0 : i64, scratch_operands = 0 : i64, tpu.core_type = #tpu.core_type<tc>, window_params = [{transform_indices = @transform_0, window_bounds = array<i64: 1, 320, 128>}, {pipeline_mode = #tpu.pipeline_mode<synchronous>, transform_indices = @transform_1, window_bounds = array<i64: 5, 128, 128>}, {transform_indices = @transform_2, window_bounds = array<i64: 1, 256, 128>}, {transform_indices = @transform_3, window_bounds = array<i64: 1, 2, 128>}]} {
    %c0 = arith.constant 0 : index
    %c0_0 = arith.constant 0 : index
    %c0_1 = arith.constant 0 : index
    %0 = vector.load %arg1[%c0, %c0_0, %c0_1] : memref<1x320x128xbf16, #tpu.memory_space<vmem>>, vector<1x256x128xbf16>
    %1 = vector.shape_cast %0 : vector<1x256x128xbf16> to vector<256x128xbf16>
    %c0_2 = arith.constant 0 : index
    %c0_3 = arith.constant 0 : index
    %c0_4 = arith.constant 0 : index
    %2 = vector.load %arg2[%c0_2, %c0_3, %c0_4] : memref<5x128x128xbf16, #tpu.memory_space<vmem>>, vector<1x128x128xbf16>
    %3 = vector.shape_cast %2 : vector<1x128x128xbf16> to vector<128x128xbf16>
    %cst = arith.constant dense<0.000000e+00> : vector<256x128xf32>
    %4 = tpu.matmul %1, %3, %cst {dimension_numbers = #tpu.dot_dimension_numbers<[1], [0], [0], [1], [0, 0, 1, 1], [], []>} : vector<256x128xbf16>, vector<128x128xbf16>, vector<256x128xf32> -> vector<256x128xf32>
    %c0_5 = arith.constant 0 : index
    %c16 = arith.constant 16 : index
    %c0_6 = arith.constant 0 : index
    %5 = vector.load %arg1[%c0_5, %c16, %c0_6] : memref<1x320x128xbf16, #tpu.memory_space<vmem>>, vector<1x256x128xbf16>
    %6 = vector.shape_cast %5 : vector<1x256x128xbf16> to vector<256x128xbf16>
    %c1 = arith.constant 1 : index
    %c0_7 = arith.constant 0 : index
    %c0_8 = arith.constant 0 : index
    %7 = vector.load %arg2[%c1, %c0_7, %c0_8] : memref<5x128x128xbf16, #tpu.memory_space<vmem>>, vector<1x128x128xbf16>
    %8 = vector.shape_cast %7 : vector<1x128x128xbf16> to vector<128x128xbf16>
    %cst_9 = arith.constant dense<0.000000e+00> : vector<256x128xf32>
    %9 = tpu.matmul %6, %8, %cst_9 {dimension_numbers = #tpu.dot_dimension_numbers<[1], [0], [0], [1], [0, 0, 1, 1], [], []>} : vector<256x128xbf16>, vector<128x128xbf16>, vector<256x128xf32> -> vector<256x128xf32>
    %10 = arith.addf %4, %9 : vector<256x128xf32>
    %c0_10 = arith.constant 0 : index
    %c32 = arith.constant 32 : index
    %c0_11 = arith.constant 0 : index
    %11 = vector.load %arg1[%c0_10, %c32, %c0_11] : memref<1x320x128xbf16, #tpu.memory_space<vmem>>, vector<1x256x128xbf16>
    %12 = vector.shape_cast %11 : vector<1x256x128xbf16> to vector<256x128xbf16>
    %c2 = arith.constant 2 : index
    %c0_12 = arith.constant 0 : index
    %c0_13 = arith.constant 0 : index
    %13 = vector.load %arg2[%c2, %c0_12, %c0_13] : memref<5x128x128xbf16, #tpu.memory_space<vmem>>, vector<1x128x128xbf16>
    %14 = vector.shape_cast %13 : vector<1x128x128xbf16> to vector<128x128xbf16>
    %cst_14 = arith.constant dense<0.000000e+00> : vector<256x128xf32>
    %15 = tpu.matmul %12, %14, %cst_14 {dimension_numbers = #tpu.dot_dimension_numbers<[1], [0], [0], [1], [0, 0, 1, 1], [], []>} : vector<256x128xbf16>, vector<128x128xbf16>, vector<256x128xf32> -> vector<256x128xf32>
    %16 = arith.addf %10, %15 : vector<256x128xf32>
    %c0_15 = arith.constant 0 : index
    %c48 = arith.constant 48 : index
    %c0_16 = arith.constant 0 : index
    %17 = vector.load %arg1[%c0_15, %c48, %c0_16] : memref<1x320x128xbf16, #tpu.memory_space<vmem>>, vector<1x256x128xbf16>
    %18 = vector.shape_cast %17 : vector<1x256x128xbf16> to vector<256x128xbf16>
    %c3 = arith.constant 3 : index
    %c0_17 = arith.constant 0 : index
    %c0_18 = arith.constant 0 : index
    %19 = vector.load %arg2[%c3, %c0_17, %c0_18] : memref<5x128x128xbf16, #tpu.memory_space<vmem>>, vector<1x128x128xbf16>
    %20 = vector.shape_cast %19 : vector<1x128x128xbf16> to vector<128x128xbf16>
    %cst_19 = arith.constant dense<0.000000e+00> : vector<256x128xf32>
    %21 = tpu.matmul %18, %20, %cst_19 {dimension_numbers = #tpu.dot_dimension_numbers<[1], [0], [0], [1], [0, 0, 1, 1], [], []>} : vector<256x128xbf16>, vector<128x128xbf16>, vector<256x128xf32> -> vector<256x128xf32>
    %22 = arith.addf %16, %21 : vector<256x128xf32>
    %c0_20 = arith.constant 0 : index
    %c64 = arith.constant 64 : index
    %c0_21 = arith.constant 0 : index
    %23 = vector.load %arg1[%c0_20, %c64, %c0_21] : memref<1x320x128xbf16, #tpu.memory_space<vmem>>, vector<1x256x128xbf16>
    %24 = vector.shape_cast %23 : vector<1x256x128xbf16> to vector<256x128xbf16>
    %c4 = arith.constant 4 : index
    %c0_22 = arith.constant 0 : index
    %c0_23 = arith.constant 0 : index
    %25 = vector.load %arg2[%c4, %c0_22, %c0_23] : memref<5x128x128xbf16, #tpu.memory_space<vmem>>, vector<1x128x128xbf16>
    %26 = vector.shape_cast %25 : vector<1x128x128xbf16> to vector<128x128xbf16>
    %cst_24 = arith.constant dense<0.000000e+00> : vector<256x128xf32>
    %27 = tpu.matmul %24, %26, %cst_24 {dimension_numbers = #tpu.dot_dimension_numbers<[1], [0], [0], [1], [0, 0, 1, 1], [], []>} : vector<256x128xbf16>, vector<128x128xbf16>, vector<256x128xf32> -> vector<256x128xf32>
    %28 = arith.addf %22, %27 : vector<256x128xf32>
    %29 = arith.truncf %28 : vector<256x128xf32> to vector<256x128xbf16>
    %c0_25 = arith.constant 0 : index
    %c0_26 = arith.constant 0 : index
    %c0_27 = arith.constant 0 : index
    %30 = vector.load %arg3[%c0_25, %c0_26, %c0_27] : memref<1x256x128xbf16, #tpu.memory_space<vmem>>, vector<1x256x128xbf16>
    %31 = vector.shape_cast %30 : vector<1x256x128xbf16> to vector<256x128xbf16>
    %32 = vector.shape_cast %29 : vector<256x128xbf16> to vector<1x256x128xbf16>
    tpu.vector_store %arg3[%c0_25, %c0_26, %c0_27], %32 {strides = array<i32>} : memref<1x256x128xbf16, #tpu.memory_space<vmem>>, vector<1x256x128xbf16>,
    %cst_28 = arith.constant dense<0.000000e+00> : vector<128xf32>
    %33 = vector.multi_reduction <add>, %28, %cst_28 [0] : vector<256x128xf32> to vector<128xf32>
    %34 = vector.shape_cast %33 : vector<128xf32> to vector<1x128xf32>
    %35 = arith.mulf %28, %28 : vector<256x128xf32>
    %cst_29 = arith.constant dense<0.000000e+00> : vector<128xf32>
    %36 = vector.multi_reduction <add>, %35, %cst_29 [0] : vector<256x128xf32> to vector<128xf32>
    %37 = vector.shape_cast %36 : vector<128xf32> to vector<1x128xf32>
    %38 = tpu.concatenate %34, %37 in 0 : vector<1x128xf32>, vector<1x128xf32> -> vector<2x128xf32>
    %c0_30 = arith.constant 0 : index
    %c0_31 = arith.constant 0 : index
    %c0_32 = arith.constant 0 : index
    %39 = vector.load %arg4[%c0_30, %c0_31, %c0_32] : memref<1x2x128xf32, #tpu.memory_space<vmem>>, vector<1x2x128xf32>
    %40 = vector.shape_cast %39 : vector<1x2x128xf32> to vector<2x128xf32>
    %41 = vector.shape_cast %38 : vector<2x128xf32> to vector<1x2x128xf32>
    tpu.vector_store %arg4[%c0_30, %c0_31, %c0_32], %41 {strides = array<i32>} : memref<1x2x128xf32, #tpu.memory_space<vmem>>, vector<1x2x128xf32>,
    return
  }
  func.func @transform_0(%arg0: i32) -> (i32, i32, i32) {
    %c0_i32 = arith.constant 0 : i32
    %c0_i32_0 = arith.constant 0 : i32
    %c0_i32_1 = arith.constant 0 : i32
    return %arg0, %c0_i32, %c0_i32_0 : i32, i32, i32
  }
  func.func @transform_1(%arg0: i32) -> (i32, i32, i32) {
    %c0_i32 = arith.constant 0 : i32
    %c0_i32_0 = arith.constant 0 : i32
    %c0_i32_1 = arith.constant 0 : i32
    %c0_i32_2 = arith.constant 0 : i32
    return %c0_i32, %c0_i32_0, %c0_i32_1 : i32, i32, i32
  }
  func.func @transform_2(%arg0: i32) -> (i32, i32, i32) {
    %c0_i32 = arith.constant 0 : i32
    %c0_i32_0 = arith.constant 0 : i32
    %c0_i32_1 = arith.constant 0 : i32
    return %arg0, %c0_i32, %c0_i32_0 : i32, i32, i32
  }
  func.func @transform_3(%arg0: i32) -> (i32, i32, i32) {
    %c0_i32 = arith.constant 0 : i32
    %c0_i32_0 = arith.constant 0 : i32
    %c0_i32_1 = arith.constant 0 : i32
    return %arg0, %c0_i32, %c0_i32_0 : i32, i32, i32
  }
}

</mosaic_0001>

<llo_original>
// kernel: tpu_custom_call.1
$region0: #{tpu_custom_call.1}
  #allocation0 [shape = 'u32[]', space=smem, size = 0x4, offset = 0x4, fixed_abs, tag = 'smem constant byte address 0x4 - core index']
  #allocation1 [shape = 'u32[72,128]{1,0:T(1,128)}', space=vmem, size = 0x9000, scoped, tag = 'internal scratch']
  %s0 = inlined_call_operand.hbm [shape: bf16[2,320,128], index: 0, kind: input, shape index: {}]
  %s1 = inlined_call_operand.hbm [shape: bf16[5,128,128], index: 1, kind: input, shape index: {}]
  %s2 = inlined_call_operand.hbm [shape: bf16[2,256,128], index: 2, kind: output, shape index: {0}]
  %s3 = inlined_call_operand.hbm [shape: f32[2,2,128], index: 3, kind: output, shape index: {1}]
  %4 = xla_tuple %s2, %s3
  %s5 = sld [smem:[#allocation0]]
  $region57: #{tpu_custom_call.1} parent=0
    _
  %s7 = ssub.s32 1, %s5
  %s8 = scalar_select 0, %s7, %s5
  $region1: #{tpu_custom_call.1} parent=0
    #allocation2 [shape = 'u8[163840]{0}', space=vmem, size = 0x28000, scoped, tag = 'input window, operand 0']
    #allocation3 [shape = 's32[2]{0}', space=sflag, size = 0x8, scoped, tag = 'scoped memory for tpu_custom_call.1']
    #allocation4 [shape = 's32[2]{0}', space=sflag, size = 0x8, scoped, tag = 'scoped memory for tpu_custom_call.1']
    #allocation5 [shape = 'u8[163840]{0}', space=vmem, size = 0x28000, scoped, tag = 'input window, operand 1, single buffered']
    #allocation6 [shape = 's32[1]{0}', space=sflag, size = 0x4, scoped, tag = 'scoped memory for tpu_custom_call.1']
    #allocation7 [shape = 'u8[131072]{0}', space=vmem, size = 0x20000, scoped, tag = 'output window, operand 0']
    #allocation8 [shape = 'u8[2048]{0}', space=vmem, size = 0x800, scoped, tag = 'output window, operand 1']
    #allocation9 [shape = 's32[2]{0}', space=sflag, size = 0x8, scoped, tag = 'scoped memory for tpu_custom_call.1']
    %9 = vsyncpa [#allocation3], 0
    %s10 = scalar_lea.sflag [#allocation3], 1
    %11 = vsyncpa %s10, 0
    %12 = vsyncpa [#allocation6], 0
    %13 = vsyncpa [#allocation4], 0
    %s14 = scalar_lea.sflag [#allocation4], 1
    %15 = vsyncpa %s14, 0
    %16 = vsyncpa [#allocation9], 0
    %s17 = scalar_lea.sflag [#allocation9], 1
    %18 = vsyncpa %s17, 0
    loop: start=0, step=1, limit=4
    $region2: #{tpu_custom_call.1} parent=1 // loop_pre_header
      _
    $region3: #{tpu_custom_call.1} parent=1 // loop_header
      %s20 = sphi 0, %s24
      %p21 = scmp.ge.s32.totalorder %s20, 4
      %s30 = sphi 0, %s32
      %s33 = sphi 0, %s30
      %s34 = sphi 0, %s33
      %s50 = sphi 0, %s34
      %s54 = sphi 0, %s54
      %s56 = sphi 0, %s54
      %s57 = sphi 0, %s56
      %s71 = sphi 0, %s57
      %s77 = sphi 0, %s79
      %s80 = sphi 0, %s77
      %s81 = sphi 0, %s80
      %s97 = sphi 0, %s81
      %s103 = sphi 0, %s105
      %s106 = sphi 0, %s103
      %s107 = sphi 0, %s106
      %s123 = sphi 0, %s107
    $region4: #{tpu_custom_call.1} parent=1 // loop_header_branch
      %23 = sbr.rel (%p21) target = $region8
    $region5: #{tpu_custom_call.1} parent=1 // loop_body
      %s25 = ssub.s32 %s20, 1
      %s26 = ssub.s32 %s20, 2
      %s27 = sadd.s32 %s20, 1
      %s28 = ssub.s32 %s20, %s27
      %p29 = scmp.eq.s32.totalorder %s28, 0
      %s31 = sadd.s32 %s30, 1
      %s32 = scalar_select %p29, %s30, %s31
      %p35 = pneg %p29
      %p36 = scmp.eq.s32.totalorder %s20, 1
      %p37 = por %p35, %p36
      %p38 = scmp.ne.s32.totalorder %s30, %s33
      %p39 = scmp.eq.s32.totalorder %s20, 0
      %p40 = por %p38, %p39
      %p41 = scmp.ne.s32.totalorder %s30, %s33
      %p42 = scmp.eq.s32.totalorder %s25, 1
      %p43 = por %p41, %p42
      %p44 = scmp.ne.s32.totalorder %s33, %s34
      %p45 = scmp.eq.s32.totalorder %s25, 0
      %p46 = por %p44, %p45
      %p47 = scmp.ne.s32.totalorder %s33, %s34
      %p48 = scmp.eq.s32.totalorder %s26, 1
      %p49 = por %p47, %p48
      %p51 = scmp.ne.s32.totalorder %s34, %s50
      %p52 = scmp.eq.s32.totalorder %s26, 0
      %p53 = por %p51, %p52
      %s55 = sadd.s32 %s54, 1
      %p58 = scmp.eq.s32.totalorder %s20, 1
      %p59 = scmp.ne.s32.totalorder %s54, %s56
      %p60 = scmp.eq.s32.totalorder %s20, 0
      %p61 = por %p59, %p60
      %p62 = scmp.ne.s32.totalorder %s54, %s56
      %p63 = scmp.eq.s32.totalorder %s25, 1
      %p64 = por %p62, %p63
      %p65 = scmp.ne.s32.totalorder %s56, %s57
      %p66 = scmp.eq.s32.totalorder %s25, 0
      %p67 = por %p65, %p66
      %p68 = scmp.ne.s32.totalorder %s56, %s57
      %p69 = scmp.eq.s32.totalorder %s26, 1
      %p70 = por %p68, %p69
      %p72 = scmp.ne.s32.totalorder %s57, %s71
      %p73 = scmp.eq.s32.totalorder %s26, 0
      %p74 = por %p72, %p73
      %s75 = ssub.s32 %s20, %s27
      %p76 = scmp.eq.s32.totalorder %s75, 0
      %s78 = sadd.s32 %s77, 1
      %s79 = scalar_select %p76, %s77, %s78
      %p82 = pneg %p76
      %p83 = scmp.eq.s32.totalorder %s20, 1
      %p84 = por %p82, %p83
      %p85 = scmp.ne.s32.totalorder %s77, %s80
      %p86 = scmp.eq.s32.totalorder %s20, 0
      %p87 = por %p85, %p86
      %p88 = scmp.ne.s32.totalorder %s77, %s80
      %p89 = scmp.eq.s32.totalorder %s25, 1
      %p90 = por %p88, %p89
      %p91 = scmp.ne.s32.totalorder %s80, %s81
      %p92 = scmp.eq.s32.totalorder %s25, 0
      %p93 = por %p91, %p92
      %p94 = scmp.ne.s32.totalorder %s80, %s81
      %p95 = scmp.eq.s32.totalorder %s26, 1
      %p96 = por %p94, %p95
      %p98 = scmp.ne.s32.totalorder %s81, %s97
      %p99 = scmp.eq.s32.totalorder %s26, 0
      %p100 = por %p98, %p99
      %s101 = ssub.s32 %s20, %s27
      %p102 = scmp.eq.s32.totalorder %s101, 0
      %s104 = sadd.s32 %s103, 1
      %s105 = scalar_select %p102, %s103, %s104
      %p108 = pneg %p102
      %p109 = scmp.eq.s32.totalorder %s20, 1
      %p110 = por %p108, %p109
      %p111 = scmp.ne.s32.totalorder %s103, %s106
      %p112 = scmp.eq.s32.totalorder %s20, 0
      %p113 = por %p111, %p112
      %p114 = scmp.ne.s32.totalorder %s103, %s106
      %p115 = scmp.eq.s32.totalorder %s25, 1
      %p116 = por %p114, %p115
      %p117 = scmp.ne.s32.totalorder %s106, %s107
      %p118 = scmp.eq.s32.totalorder %s25, 0
      %p119 = por %p117, %p118
      %p120 = scmp.ne.s32.totalorder %s106, %s107
      %p121 = scmp.eq.s32.totalorder %s26, 1
      %p122 = por %p120, %p121
      %p124 = scmp.ne.s32.totalorder %s107, %s123
      %p125 = scmp.eq.s32.totalorder %s26, 0
      %p126 = por %p124, %p125
      %p127 = scmp.le.s32.totalorder 1, %s20
      %p128 = scmp.lt.s32.totalorder %s20, 3
      %p129 = pnand %p127, %p128
      %p130 = pneg %p129
      // Predicated region
      $region9: #{tpu_custom_call.1} parent=5 // pred_check
        _
      $region10: #{tpu_custom_call.1} parent=5 // pred_check_branch
        %132 = sbr.rel (%p129) target = $region12
      $region11: #{tpu_custom_call.1} parent=5 // pred_region
        %s133 = ssub.s32 %s20, 1
        // Predicated region
        $region13: #{tpu_custom_call.1} parent=11 // pred_check
          %p134 = pneg %p67
        $region14: #{tpu_custom_call.1} parent=11 // pred_check_branch
          %136 = sbr.rel (%p134) target = $region16
        $region15: #{tpu_custom_call.1} parent=11 // pred_region
          %138 = vsyncadd [#allocation6], 0
          %s139 = sshll.u32 %s1, 4
          %s140 = int_to_ptr.hbm [resolvable:$true] %s139
          %s141 = sshll.u32 [#allocation5], 4
          %s142 = int_to_ptr.vmem [resolvable:$true] %s141
          %147 = dma.hbm_to_vmem [thread:$0]  %s140, 5120, %s142, [#allocation6], 64, 64, 4
        $region16: #{tpu_custom_call.1} parent=11 // pred_fallthru
          _
      $region12: #{tpu_custom_call.1} parent=5 // pred_fallthru
        _
      %p148 = scmp.lt.s32.totalorder %s20, 2
      // Predicated region
      $region17: #{tpu_custom_call.1} parent=5 // pred_check
        %p149 = pneg %p148
      $region18: #{tpu_custom_call.1} parent=5 // pred_check_branch
        %151 = sbr.rel (%p149) target = $region20
      $region19: #{tpu_custom_call.1} parent=5 // pred_region
        // Predicated region
        $region21: #{tpu_custom_call.1} parent=19 // pred_check
          %p152 = pneg %p40
        $region22: #{tpu_custom_call.1} parent=19 // pred_check_branch
          %154 = sbr.rel (%p152) target = $region24
        $region23: #{tpu_custom_call.1} parent=19 // pred_region
          %s155 = sand.u32 %s30, 1
          %s156 = scalar_lea.sflag [#allocation3], %s155
          %s157 = sand.u32 %s30, 1
          %s158 = smul.addr %s157, 160
          %s159 = scalar_lea.vmem [#allocation2], %s158
          %161 = vsyncadd %s156, 0
          %s162 = smul.addr %s20, 40
          %s163 = smul.addr %s162, 4
          %s164 = scalar_lea.hbm %s0, %s163
          %s165 = sshll.u32 %s164, 4
          %s166 = int_to_ptr.hbm [resolvable:$true] %s165
          %s167 = sshll.u32 %s159, 4
          %s168 = int_to_ptr.vmem [resolvable:$true] %s167
          %173 = dma.hbm_to_vmem [thread:$0]  %s166, 2560, %s168, %s156, 64, 64, 4
        $region24: #{tpu_custom_call.1} parent=19 // pred_fallthru
          _
      $region20: #{tpu_custom_call.1} parent=5 // pred_fallthru
        _
      %p174 = scmp.le.s32.totalorder 1, %s20
      %p175 = scmp.lt.s32.totalorder %s20, 3
      %p176 = pnand %p174, %p175
      %p177 = pneg %p176
      // Predicated region
      $region25: #{tpu_custom_call.1} parent=5 // pred_check
        _
      $region26: #{tpu_custom_call.1} parent=5 // pred_check_branch
        %179 = sbr.rel (%p176) target = $region28
      $region27: #{tpu_custom_call.1} parent=5 // pred_region
        %s180 = ssub.s32 %s20, 1
        %s181 = sand.u32 %s33, 1
        %s182 = scalar_lea.sflag [#allocation3], %s181
        %s183 = sand.u32 %s33, 1
        %s184 = smul.addr %s183, 160
        %s185 = scalar_lea.vmem [#allocation2], %s184
        // Predicated region
        $region29: #{tpu_custom_call.1} parent=27 // pred_check
          %p186 = pneg %p46
        $region30: #{tpu_custom_call.1} parent=27 // pred_check_branch
          %188 = sbr.rel (%p186) target = $region32
        $region31: #{tpu_custom_call.1} parent=27 // pred_region
          %190 = dma.done %s182, 2560
        $region32: #{tpu_custom_call.1} parent=27 // pred_fallthru
          _
        // Predicated region
        $region33: #{tpu_custom_call.1} parent=27 // pred_check
          %p191 = pneg %p67
        $region34: #{tpu_custom_call.1} parent=27 // pred_check_branch
          %193 = sbr.rel (%p191) target = $region36
        $region35: #{tpu_custom_call.1} parent=27 // pred_region
          %195 = dma.done [#allocation6], 5120
        $region36: #{tpu_custom_call.1} parent=27 // pred_fallthru
          _
        %s196 = sand.u32 %s33, 1
        %s197 = scalar_lea.sflag [#allocation3], %s196
        %s198 = sand.u32 %s33, 1
        %s199 = smul.addr %s198, 160
        %s200 = scalar_lea.vmem [#allocation2], %s199
        %p201 = pneg %p46
        %p202 = pneg %p43
        %p203 = pneg %p67
        %p204 = pneg %p64
        %p205 = pneg %p93
        %p206 = pneg %p90
        %s207 = sand.u32 %s80, 1
        %s208 = scalar_lea.sflag [#allocation4], %s207
        %s209 = sand.u32 %s80, 1
        %s210 = smul.addr %s209, 128
        %s211 = scalar_lea.vmem [#allocation7], %s210
        %p212 = pneg %p119
        %p213 = pneg %p116
        %s214 = sand.u32 %s106, 1
        %s215 = scalar_lea.sflag [#allocation9], %s214
        %s216 = sand.u32 %s106, 1
        %s217 = smul.addr %s216, 2
        %s218 = scalar_lea.vmem [#allocation8], %s217
        %v219 = vld [vmem:[%s185] sm:$0xf]
        %v220 = vld [vmem:[%s185 + $0x4] sm:$0xf]
        %v221 = vld [vmem:[%s185 + $0x8] sm:$0xf]
        %v222 = vld [vmem:[%s185 + $0xc] sm:$0xf]
        %v223 = vld [vmem:[%s185 + $0x10] sm:$0xf]
        %v224 = vld [vmem:[%s185 + $0x14] sm:$0xf]
        %v225 = vld [vmem:[%s185 + $0x18] sm:$0xf]
        %v226 = vld [vmem:[%s185 + $0x1c] sm:$0xf]
        %v227 = vld [vmem:[%s185 + $0x20] sm:$0xf]
        %v228 = vld [vmem:[%s185 + $0x24] sm:$0xf]
        %v229 = vld [vmem:[%s185 + $0x28] sm:$0xf]
        %v230 = vld [vmem:[%s185 + $0x2c] sm:$0xf]
        %v231 = vld [vmem:[%s185 + $0x30] sm:$0xf]
        %v232 = vld [vmem:[%s185 + $0x34] sm:$0xf]
        %v233 = vld [vmem:[%s185 + $0x38] sm:$0xf]
        %v234 = vld [vmem:[%s185 + $0x3c] sm:$0xf]
        %v235 = vld [vmem:[%s185 + $0x40] sm:$0xf]
        %v236 = vld [vmem:[%s185 + $0x44] sm:$0xf]
        %v237 = vld [vmem:[%s185 + $0x48] sm:$0xf]
        %v238 = vld [vmem:[%s185 + $0x4c] sm:$0xf]
        %v239 = vld [vmem:[%s185 + $0x50] sm:$0xf]
        %v240 = vld [vmem:[%s185 + $0x54] sm:$0xf]
        %v241 = vld [vmem:[%s185 + $0x58] sm:$0xf]
        %v242 = vld [vmem:[%s185 + $0x5c] sm:$0xf]
        %v243 = vld [vmem:[%s185 + $0x60] sm:$0xf]
        %v244 = vld [vmem:[%s185 + $0x64] sm:$0xf]
        %v245 = vld [vmem:[%s185 + $0x68] sm:$0xf]
        %v246 = vld [vmem:[%s185 + $0x6c] sm:$0xf]
        %v247 = vld [vmem:[%s185 + $0x70] sm:$0xf]
        %v248 = vld [vmem:[%s185 + $0x74] sm:$0xf]
        %v249 = vld [vmem:[%s185 + $0x78] sm:$0xf]
        %v250 = vld [vmem:[%s185 + $0x7c] sm:$0xf]
        %v251 = vld [vmem:[#allocation5] sm:$0xf]
        %v252 = vld [vmem:[#allocation5 + $0x4] sm:$0xf]
        %v253 = vld [vmem:[#allocation5 + $0x8] sm:$0xf]
        %v254 = vld [vmem:[#allocation5 + $0xc] sm:$0xf]
        %v255 = vld [vmem:[#allocation5 + $0x10] sm:$0xf]
        %v256 = vld [vmem:[#allocation5 + $0x14] sm:$0xf]
        %v257 = vld [vmem:[#allocation5 + $0x18] sm:$0xf]
        %v258 = vld [vmem:[#allocation5 + $0x1c] sm:$0xf]
        %v259 = vld [vmem:[#allocation5 + $0x20] sm:$0xf]
        %v260 = vld [vmem:[#allocation5 + $0x24] sm:$0xf]
        %v261 = vld [vmem:[#allocation5 + $0x28] sm:$0xf]
        %v262 = vld [vmem:[#allocation5 + $0x2c] sm:$0xf]
        %v263 = vld [vmem:[#allocation5 + $0x30] sm:$0xf]
        %v264 = vld [vmem:[#allocation5 + $0x34] sm:$0xf]
        %v265 = vld [vmem:[#allocation5 + $0x38] sm:$0xf]
        %v266 = vld [vmem:[#allocation5 + $0x3c] sm:$0xf]
        %v267 = vld [vmem:[%s185 + $0x80] sm:$0xf]
        %v268 = vld [vmem:[%s185 + $0x84] sm:$0xf]
        %s269 = scalar_lea.vmem [#allocation5], 64
        %v270 = vld [vmem:[%s269] sm:$0xf]
        %v271 = vld [vmem:[%s269 + $0x4] sm:$0xf]
        %v272 = vld [vmem:[%s269 + $0x8] sm:$0xf]
        %v273 = vld [vmem:[%s269 + $0xc] sm:$0xf]
        %v274 = vld [vmem:[%s269 + $0x10] sm:$0xf]
        %v275 = vld [vmem:[%s269 + $0x14] sm:$0xf]
        %v276 = vld [vmem:[%s269 + $0x18] sm:$0xf]
        %v277 = vld [vmem:[%s269 + $0x1c] sm:$0xf]
        %v278 = vld [vmem:[%s269 + $0x20] sm:$0xf]
        %v279 = vld [vmem:[%s269 + $0x24] sm:$0xf]
        %v280 = vld [vmem:[%s269 + $0x28] sm:$0xf]
        %v281 = vld [vmem:[%s269 + $0x2c] sm:$0xf]
        %v282 = vld [vmem:[%s269 + $0x30] sm:$0xf]
        %v283 = vld [vmem:[%s269 + $0x34] sm:$0xf]
        %v284 = vld [vmem:[%s269 + $0x38] sm:$0xf]
        %v285 = vld [vmem:[%s269 + $0x3c] sm:$0xf]
        %v318 = vunpack.c.l.b16 %v221
        %v319 = vunpack.c.l.b16 %v222
        %v320 = vunpack.c.l.b16 %v223
        %v321 = vunpack.c.l.b16 %v224
        %v322 = vunpack.c.l.b16 %v225
        %v323 = vunpack.c.l.b16 %v226
        %v324 = vunpack.c.l.b16 %v227
        %v325 = vunpack.c.l.b16 %v228
        %v326 = vunpack.c.l.b16 %v229
        %v327 = vunpack.c.l.b16 %v230
        %v328 = vunpack.c.l.b16 %v231
        %v329 = vunpack.c.l.b16 %v232
        %v330 = vunpack.c.l.b16 %v233
        %v331 = vunpack.c.l.b16 %v234
        %v332 = vunpack.c.l.b16 %v235
        %v333 = vunpack.c.l.b16 %v236
        %v334 = vunpack.c.l.b16 %v237
        %v335 = vunpack.c.l.b16 %v238
        %v336 = vunpack.c.l.b16 %v239
        %v337 = vunpack.c.l.b16 %v240
        %v338 = vunpack.c.l.b16 %v241
        %v339 = vunpack.c.l.b16 %v242
        %v340 = vunpack.c.l.b16 %v243
        %v341 = vunpack.c.l.b16 %v244
        %v342 = vunpack.c.l.b16 %v245
        %v343 = vunpack.c.l.b16 %v246
        %v344 = vunpack.c.l.b16 %v247
        %v345 = vunpack.c.l.b16 %v248
        %v346 = vunpack.c.l.b16 %v249
        %v347 = vunpack.c.l.b16 %v250
        %v348 = vunpack.c.l.b16 %v267
        %v349 = vunpack.c.l.b16 %v268
        %v350 = vpack.c.b16 %v319, %v318
        %v351 = vpack.c.b16 %v321, %v320
        %v352 = vpack.c.b16 %v323, %v322
        %v353 = vpack.c.b16 %v325, %v324
        %v354 = vpack.c.b16 %v327, %v326
        %v355 = vpack.c.b16 %v329, %v328
        %v356 = vpack.c.b16 %v331, %v330
        %v357 = vpack.c.b16 %v333, %v332
        %v358 = vpack.c.b16 %v335, %v334
        %v359 = vpack.c.b16 %v337, %v336
        %v360 = vpack.c.b16 %v339, %v338
        %v361 = vpack.c.b16 %v341, %v340
        %v362 = vpack.c.b16 %v343, %v342
        %v363 = vpack.c.b16 %v345, %v344
        %v364 = vpack.c.b16 %v347, %v346
        %v365 = vpack.c.b16 %v349, %v348
        %v398 = vunpack.c.l.b16 %v270
        %v399 = vunpack.c.l.b16 %v271
        %v400 = vunpack.c.l.b16 %v272
        %v401 = vunpack.c.l.b16 %v273
        %v402 = vunpack.c.l.b16 %v274
        %v403 = vunpack.c.l.b16 %v275
        %v404 = vunpack.c.l.b16 %v276
        %v405 = vunpack.c.l.b16 %v277
        %v406 = vunpack.c.l.b16 %v278
        %v407 = vunpack.c.l.b16 %v279
        %v408 = vunpack.c.l.b16 %v280
        %v409 = vunpack.c.l.b16 %v281
        %v410 = vunpack.c.l.b16 %v282
        %v411 = vunpack.c.l.b16 %v283
        %v412 = vunpack.c.l.b16 %v284
        %v413 = vunpack.c.l.b16 %v285
        %v414 = vpack.c.b16 %v399, %v398
        %v415 = vpack.c.b16 %v401, %v400
        %v416 = vpack.c.b16 %v403, %v402
        %v417 = vpack.c.b16 %v405, %v404
        %v418 = vpack.c.b16 %v407, %v406
        %v419 = vpack.c.b16 %v409, %v408
        %v420 = vpack.c.b16 %v411, %v410
        %v421 = vpack.c.b16 %v413, %v412
        %430 = vmatpush.bf16.msra.mxu0 %v421
        %431 = vmatpush.bf16.msra.mxu0 %v420
        %432 = vmatpush.bf16.msra.mxu0 %v419
        %433 = vmatpush.bf16.msra.mxu0 %v418
        %434 = vmatpush.bf16.msra.mxu0 %v417
        %435 = vmatpush.bf16.msra.mxu0 %v416
        %436 = vmatpush.bf16.msra.mxu0 %v415
        %437 = vmatpush.bf16.msra.mxu0 %v414
        %438 = vmatmul.bf16.gmra.mxu0 %v350
        %v439 = vpop.f32.mrf.mxu0
        %v440 = vadd.f32 0.0, %v439
        %v441 = vpop.f32.mrf.mxu0
        %v442 = vadd.f32 0.0, %v441
        %443 = vmatmul.bf16.gmra.mxu0 %v351
        %v444 = vpop.f32.mrf.mxu0
        %v445 = vadd.f32 0.0, %v444
        %v446 = vpop.f32.mrf.mxu0
        %v447 = vadd.f32 0.0, %v446
        %448 = vmatmul.bf16.gmra.mxu0 %v352
        %v449 = vpop.f32.mrf.mxu0
        %v450 = vadd.f32 0.0, %v449
        %v451 = vpop.f32.mrf.mxu0
        %v452 = vadd.f32 0.0, %v451
        %453 = vmatmul.bf16.gmra.mxu0 %v353
        %v454 = vpop.f32.mrf.mxu0
        %v455 = vadd.f32 0.0, %v454
        %v456 = vpop.f32.mrf.mxu0
        %v457 = vadd.f32 0.0, %v456
        %458 = vmatmul.bf16.gmra.mxu0 %v354
        %v459 = vpop.f32.mrf.mxu0
        %v460 = vadd.f32 0.0, %v459
        %v461 = vpop.f32.mrf.mxu0
        %v462 = vadd.f32 0.0, %v461
        %463 = vmatmul.bf16.gmra.mxu0 %v355
        %v464 = vpop.f32.mrf.mxu0
        %v465 = vadd.f32 0.0, %v464
        %v466 = vpop.f32.mrf.mxu0
        %v467 = vadd.f32 0.0, %v466
        %468 = vmatmul.bf16.gmra.mxu0 %v356
        %v469 = vpop.f32.mrf.mxu0
        %v470 = vadd.f32 0.0, %v469
        %v471 = vpop.f32.mrf.mxu0
        %v472 = vadd.f32 0.0, %v471
        %473 = vmatmul.bf16.gmra.mxu0 %v357
        %v474 = vpop.f32.mrf.mxu0
        %v475 = vadd.f32 0.0, %v474
        %v476 = vpop.f32.mrf.mxu0
        %v477 = vadd.f32 0.0, %v476
        %478 = vmatmul.bf16.gmra.mxu0 %v358
        %v479 = vpop.f32.mrf.mxu0
        %v480 = vadd.f32 0.0, %v479
        %v481 = vpop.f32.mrf.mxu0
        %v482 = vadd.f32 0.0, %v481
        %483 = vmatmul.bf16.gmra.mxu0 %v359
        %v484 = vpop.f32.mrf.mxu0
        %v485 = vadd.f32 0.0, %v484
        %v486 = vpop.f32.mrf.mxu0
        %v487 = vadd.f32 0.0, %v486
        %488 = vmatmul.bf16.gmra.mxu0 %v360
        %v489 = vpop.f32.mrf.mxu0
        %v490 = vadd.f32 0.0, %v489
        %v491 = vpop.f32.mrf.mxu0
        %v492 = vadd.f32 0.0, %v491
        %493 = vmatmul.bf16.gmra.mxu0 %v361
        %v494 = vpop.f32.mrf.mxu0
        %v495 = vadd.f32 0.0, %v494
        %v496 = vpop.f32.mrf.mxu0
        %v497 = vadd.f32 0.0, %v496
        %498 = vmatmul.bf16.gmra.mxu0 %v362
        %v499 = vpop.f32.mrf.mxu0
        %v500 = vadd.f32 0.0, %v499
        %v501 = vpop.f32.mrf.mxu0
        %v502 = vadd.f32 0.0, %v501
        %503 = vmatmul.bf16.gmra.mxu0 %v363
        %v504 = vpop.f32.mrf.mxu0
        %v505 = vadd.f32 0.0, %v504
        %v506 = vpop.f32.mrf.mxu0
        %v507 = vadd.f32 0.0, %v506
        %508 = vmatmul.bf16.gmra.mxu0 %v364
        %v509 = vpop.f32.mrf.mxu0
        %v510 = vadd.f32 0.0, %v509
        %v511 = vpop.f32.mrf.mxu0
        %v512 = vadd.f32 0.0, %v511
        %513 = vmatmul.bf16.gmra.mxu0 %v365
        %v514 = vpop.f32.mrf.mxu0
        %v515 = vadd.f32 0.0, %v514
        %v516 = vpop.f32.mrf.mxu0
        %v517 = vadd.f32 0.0, %v516
        %518 = vdwg.mxu0
        %v521 = vunpack.c.l.b16 %v219
        %v522 = vunpack.c.l.b16 %v220
        %v523 = vpack.c.b16 %v522, %v521
        %v541 = vunpack.c.l.b16 %v251
        %v542 = vunpack.c.l.b16 %v252
        %v543 = vunpack.c.l.b16 %v253
        %v544 = vunpack.c.l.b16 %v254
        %v545 = vunpack.c.l.b16 %v255
        %v546 = vunpack.c.l.b16 %v256
        %v547 = vunpack.c.l.b16 %v257
        %v548 = vunpack.c.l.b16 %v258
        %v549 = vunpack.c.l.b16 %v259
        %v550 = vunpack.c.l.b16 %v260
        %v551 = vunpack.c.l.b16 %v261
        %v552 = vunpack.c.l.b16 %v262
        %v553 = vunpack.c.l.b16 %v263
        %v554 = vunpack.c.l.b16 %v264
        %v555 = vunpack.c.l.b16 %v265
        %v556 = vunpack.c.l.b16 %v266
        %v557 = vpack.c.b16 %v542, %v541
        %v558 = vpack.c.b16 %v544, %v543
        %v559 = vpack.c.b16 %v546, %v545
        %v560 = vpack.c.b16 %v548, %v547
        %v561 = vpack.c.b16 %v550, %v549
        %v562 = vpack.c.b16 %v552, %v551
        %v563 = vpack.c.b16 %v554, %v553
        %v564 = vpack.c.b16 %v556, %v555
        %573 = vmatpush.bf16.msra.mxu0 %v564
        %574 = vmatpush.bf16.msra.mxu0 %v563
        %575 = vmatpush.bf16.msra.mxu0 %v562
        %576 = vmatpush.bf16.msra.mxu0 %v561
        %577 = vmatpush.bf16.msra.mxu0 %v560
        %578 = vmatpush.bf16.msra.mxu0 %v559
        %579 = vmatpush.bf16.msra.mxu0 %v558
        %580 = vmatpush.bf16.msra.mxu0 %v557
        %581 = vmatmul.bf16.gmra.mxu0 %v523
        %v582 = vpop.f32.mrf.mxu0
        %v583 = vadd.f32 %v440, %v582
        %v584 = vpop.f32.mrf.mxu0
        %v585 = vadd.f32 %v442, %v584
        %586 = vmatmul.bf16.gmra.mxu0 %v350
        %v587 = vpop.f32.mrf.mxu0
        %v588 = vadd.f32 %v445, %v587
        %v589 = vpop.f32.mrf.mxu0
        %v590 = vadd.f32 %v447, %v589
        %591 = vmatmul.bf16.gmra.mxu0 %v351
        %v592 = vpop.f32.mrf.mxu0
        %v593 = vadd.f32 %v450, %v592
        %v594 = vpop.f32.mrf.mxu0
        %v595 = vadd.f32 %v452, %v594
        %596 = vmatmul.bf16.gmra.mxu0 %v352
        %v597 = vpop.f32.mrf.mxu0
        %v598 = vadd.f32 %v455, %v597
        %v599 = vpop.f32.mrf.mxu0
        %v600 = vadd.f32 %v457, %v599
        %601 = vmatmul.bf16.gmra.mxu0 %v353
        %v602 = vpop.f32.mrf.mxu0
        %v603 = vadd.f32 %v460, %v602
        %v604 = vpop.f32.mrf.mxu0
        %v605 = vadd.f32 %v462, %v604
        %606 = vmatmul.bf16.gmra.mxu0 %v354
        %v607 = vpop.f32.mrf.mxu0
        %v608 = vadd.f32 %v465, %v607
        %v609 = vpop.f32.mrf.mxu0
        %v610 = vadd.f32 %v467, %v609
        %611 = vmatmul.bf16.gmra.mxu0 %v355
        %v612 = vpop.f32.mrf.mxu0
        %v613 = vadd.f32 %v470, %v612
        %v614 = vpop.f32.mrf.mxu0
        %v615 = vadd.f32 %v472, %v614
        %616 = vmatmul.bf16.gmra.mxu0 %v356
        %v617 = vpop.f32.mrf.mxu0
        %v618 = vadd.f32 %v475, %v617
        %v619 = vpop.f32.mrf.mxu0
        %v620 = vadd.f32 %v477, %v619
        %621 = vmatmul.bf16.gmra.mxu0 %v357
        %v622 = vpop.f32.mrf.mxu0
        %v623 = vadd.f32 %v480, %v622
        %v624 = vpop.f32.mrf.mxu0
        %v625 = vadd.f32 %v482, %v624
        %626 = vmatmul.bf16.gmra.mxu0 %v358
        %v627 = vpop.f32.mrf.mxu0
        %v628 = vadd.f32 %v485, %v627
        %v629 = vpop.f32.mrf.mxu0
        %v630 = vadd.f32 %v487, %v629
        %631 = vmatmul.bf16.gmra.mxu0 %v359
        %v632 = vpop.f32.mrf.mxu0
        %v633 = vadd.f32 %v490, %v632
        %v634 = vpop.f32.mrf.mxu0
        %v635 = vadd.f32 %v492, %v634
        %636 = vmatmul.bf16.gmra.mxu0 %v360
        %v637 = vpop.f32.mrf.mxu0
        %v638 = vadd.f32 %v495, %v637
        %v639 = vpop.f32.mrf.mxu0
        %v640 = vadd.f32 %v497, %v639
        %641 = vmatmul.bf16.gmra.mxu0 %v361
        %v642 = vpop.f32.mrf.mxu0
        %v643 = vadd.f32 %v500, %v642
        %v644 = vpop.f32.mrf.mxu0
        %v645 = vadd.f32 %v502, %v644
        %646 = vmatmul.bf16.gmra.mxu0 %v362
        %v647 = vpop.f32.mrf.mxu0
        %v648 = vadd.f32 %v505, %v647
        %v649 = vpop.f32.mrf.mxu0
        %v650 = vadd.f32 %v507, %v649
        %651 = vmatmul.bf16.gmra.mxu0 %v363
        %v652 = vpop.f32.mrf.mxu0
        %v653 = vadd.f32 %v510, %v652
        %v654 = vpop.f32.mrf.mxu0
        %v655 = vadd.f32 %v512, %v654
        %656 = vmatmul.bf16.gmra.mxu0 %v364
        %v657 = vpop.f32.mrf.mxu0
        %v658 = vadd.f32 %v515, %v657
        %v659 = vpop.f32.mrf.mxu0
        %v660 = vadd.f32 %v517, %v659
        %661 = vdwg.mxu0
        %v662 = vld [vmem:[%s185 + $0x10] sm:$0xf]
        %v663 = vld [vmem:[%s185 + $0x14] sm:$0xf]
        %v664 = vld [vmem:[%s185 + $0x18] sm:$0xf]
        %v665 = vld [vmem:[%s185 + $0x1c] sm:$0xf]
        %v666 = vld [vmem:[%s185 + $0x20] sm:$0xf]
        %v667 = vld [vmem:[%s185 + $0x24] sm:$0xf]
        %v668 = vld [vmem:[%s185 + $0x28] sm:$0xf]
        %v669 = vld [vmem:[%s185 + $0x2c] sm:$0xf]
        %v670 = vld [vmem:[%s185 + $0x30] sm:$0xf]
        %v671 = vld [vmem:[%s185 + $0x34] sm:$0xf]
        %v672 = vld [vmem:[%s185 + $0x38] sm:$0xf]
        %v673 = vld [vmem:[%s185 + $0x3c] sm:$0xf]
        %v674 = vld [vmem:[%s185 + $0x40] sm:$0xf]
        %v675 = vld [vmem:[%s185 + $0x44] sm:$0xf]
        %v676 = vld [vmem:[%s185 + $0x48] sm:$0xf]
        %v677 = vld [vmem:[%s185 + $0x4c] sm:$0xf]
        %v678 = vld [vmem:[%s185 + $0x50] sm:$0xf]
        %v679 = vld [vmem:[%s185 + $0x54] sm:$0xf]
        %v680 = vld [vmem:[%s185 + $0x58] sm:$0xf]
        %v681 = vld [vmem:[%s185 + $0x5c] sm:$0xf]
        %v682 = vld [vmem:[%s185 + $0x60] sm:$0xf]
        %v683 = vld [vmem:[%s185 + $0x64] sm:$0xf]
        %v684 = vld [vmem:[%s185 + $0x68] sm:$0xf]
        %v685 = vld [vmem:[%s185 + $0x6c] sm:$0xf]
        %v686 = vld [vmem:[%s185 + $0x70] sm:$0xf]
        %v687 = vld [vmem:[%s185 + $0x74] sm:$0xf]
        %v688 = vld [vmem:[%s185 + $0x78] sm:$0xf]
        %v689 = vld [vmem:[%s185 + $0x7c] sm:$0xf]
        %v690 = vld [vmem:[%s185 + $0x80] sm:$0xf]
        %v691 = vld [vmem:[%s185 + $0x84] sm:$0xf]
        %v692 = vld [vmem:[%s185 + $0x88] sm:$0xf]
        %v693 = vld [vmem:[%s185 + $0x8c] sm:$0xf]
        %s694 = scalar_lea.vmem [#allocation5], 128
        %v695 = vld [vmem:[%s694] sm:$0xf]
        %v696 = vld [vmem:[%s694 + $0x4] sm:$0xf]
        %v697 = vld [vmem:[%s694 + $0x8] sm:$0xf]
        %v698 = vld [vmem:[%s694 + $0xc] sm:$0xf]
        %v699 = vld [vmem:[%s694 + $0x10] sm:$0xf]
        %v700 = vld [vmem:[%s694 + $0x14] sm:$0xf]
        %v701 = vld [vmem:[%s694 + $0x18] sm:$0xf]
        %v702 = vld [vmem:[%s694 + $0x1c] sm:$0xf]
        %v703 = vld [vmem:[%s694 + $0x20] sm:$0xf]
        %v704 = vld [vmem:[%s694 + $0x24] sm:$0xf]
        %v705 = vld [vmem:[%s694 + $0x28] sm:$0xf]
        %v706 = vld [vmem:[%s694 + $0x2c] sm:$0xf]
        %v707 = vld [vmem:[%s694 + $0x30] sm:$0xf]
        %v708 = vld [vmem:[%s694 + $0x34] sm:$0xf]
        %v709 = vld [vmem:[%s694 + $0x38] sm:$0xf]
        %v710 = vld [vmem:[%s694 + $0x3c] sm:$0xf]
        %v743 = vunpack.c.l.b16 %v662
        %v744 = vunpack.c.l.b16 %v663
        %v745 = vunpack.c.l.b16 %v664
        %v746 = vunpack.c.l.b16 %v665
        %v747 = vunpack.c.l.b16 %v666
        %v748 = vunpack.c.l.b16 %v667
        %v749 = vunpack.c.l.b16 %v668
        %v750 = vunpack.c.l.b16 %v669
        %v751 = vunpack.c.l.b16 %v670
        %v752 = vunpack.c.l.b16 %v671
        %v753 = vunpack.c.l.b16 %v672
        %v754 = vunpack.c.l.b16 %v673
        %v755 = vunpack.c.l.b16 %v674
        %v756 = vunpack.c.l.b16 %v675
        %v757 = vunpack.c.l.b16 %v676
        %v758 = vunpack.c.l.b16 %v677
        %v759 = vunpack.c.l.b16 %v678
        %v760 = vunpack.c.l.b16 %v679
        %v761 = vunpack.c.l.b16 %v680
        %v762 = vunpack.c.l.b16 %v681
        %v763 = vunpack.c.l.b16 %v682
        %v764 = vunpack.c.l.b16 %v683
        %v765 = vunpack.c.l.b16 %v684
        %v766 = vunpack.c.l.b16 %v685
        %v767 = vunpack.c.l.b16 %v686
        %v768 = vunpack.c.l.b16 %v687
        %v769 = vunpack.c.l.b16 %v688
        %v770 = vunpack.c.l.b16 %v689
        %v771 = vunpack.c.l.b16 %v690
        %v772 = vunpack.c.l.b16 %v691
        %v773 = vunpack.c.l.b16 %v692
        %v774 = vunpack.c.l.b16 %v693
        %v775 = vpack.c.b16 %v744, %v743
        %v776 = vpack.c.b16 %v746, %v745
        %v777 = vpack.c.b16 %v748, %v747
        %v778 = vpack.c.b16 %v750, %v749
        %v779 = vpack.c.b16 %v752, %v751
        %v780 = vpack.c.b16 %v754, %v753
        %v781 = vpack.c.b16 %v756, %v755
        %v782 = vpack.c.b16 %v758, %v757
        %v783 = vpack.c.b16 %v760, %v759
        %v784 = vpack.c.b16 %v762, %v761
        %v785 = vpack.c.b16 %v764, %v763
        %v786 = vpack.c.b16 %v766, %v765
        %v787 = vpack.c.b16 %v768, %v767
        %v788 = vpack.c.b16 %v770, %v769
        %v789 = vpack.c.b16 %v772, %v771
        %v790 = vpack.c.b16 %v774, %v773
        %v823 = vunpack.c.l.b16 %v695
        %v824 = vunpack.c.l.b16 %v696
        %v825 = vunpack.c.l.b16 %v697
        %v826 = vunpack.c.l.b16 %v698
        %v827 = vunpack.c.l.b16 %v699
        %v828 = vunpack.c.l.b16 %v700
        %v829 = vunpack.c.l.b16 %v701
        %v830 = vunpack.c.l.b16 %v702
        %v831 = vunpack.c.l.b16 %v703
        %v832 = vunpack.c.l.b16 %v704
        %v833 = vunpack.c.l.b16 %v705
        %v834 = vunpack.c.l.b16 %v706
        %v835 = vunpack.c.l.b16 %v707
        %v836 = vunpack.c.l.b16 %v708
        %v837 = vunpack.c.l.b16 %v709
        %v838 = vunpack.c.l.b16 %v710
        %v839 = vpack.c.b16 %v824, %v823
        %v840 = vpack.c.b16 %v826, %v825
        %v841 = vpack.c.b16 %v828, %v827
        %v842 = vpack.c.b16 %v830, %v829
        %v843 = vpack.c.b16 %v832, %v831
        %v844 = vpack.c.b16 %v834, %v833
        %v845 = vpack.c.b16 %v836, %v835
        %v846 = vpack.c.b16 %v838, %v837
        %855 = vmatpush.bf16.msra.mxu0 %v846
        %856 = vmatpush.bf16.msra.mxu0 %v845
        %857 = vmatpush.bf16.msra.mxu0 %v844
        %858 = vmatpush.bf16.msra.mxu0 %v843
        %859 = vmatpush.bf16.msra.mxu0 %v842
        %860 = vmatpush.bf16.msra.mxu0 %v841
        %861 = vmatpush.bf16.msra.mxu0 %v840
        %862 = vmatpush.bf16.msra.mxu0 %v839
        %863 = vmatmul.bf16.gmra.mxu0 %v775
        %v864 = vpop.f32.mrf.mxu0
        %v865 = vadd.f32 0.0, %v864
        %v866 = vpop.f32.mrf.mxu0
        %v867 = vadd.f32 0.0, %v866
        %868 = vmatmul.bf16.gmra.mxu0 %v776
        %v869 = vpop.f32.mrf.mxu0
        %v870 = vadd.f32 0.0, %v869
        %v871 = vpop.f32.mrf.mxu0
        %v872 = vadd.f32 0.0, %v871
        %873 = vmatmul.bf16.gmra.mxu0 %v777
        %v874 = vpop.f32.mrf.mxu0
        %v875 = vadd.f32 0.0, %v874
        %v876 = vpop.f32.mrf.mxu0
        %v877 = vadd.f32 0.0, %v876
        %878 = vmatmul.bf16.gmra.mxu0 %v778
        %v879 = vpop.f32.mrf.mxu0
        %v880 = vadd.f32 0.0, %v879
        %v881 = vpop.f32.mrf.mxu0
        %v882 = vadd.f32 0.0, %v881
        %883 = vmatmul.bf16.gmra.mxu0 %v779
        %v884 = vpop.f32.mrf.mxu0
        %v885 = vadd.f32 0.0, %v884
        %v886 = vpop.f32.mrf.mxu0
        %v887 = vadd.f32 0.0, %v886
        %888 = vmatmul.bf16.gmra.mxu0 %v780
        %v889 = vpop.f32.mrf.mxu0
        %v890 = vadd.f32 0.0, %v889
        %v891 = vpop.f32.mrf.mxu0
        %v892 = vadd.f32 0.0, %v891
        %893 = vmatmul.bf16.gmra.mxu0 %v781
        %v894 = vpop.f32.mrf.mxu0
        %v895 = vadd.f32 0.0, %v894
        %v896 = vpop.f32.mrf.mxu0
        %v897 = vadd.f32 0.0, %v896
        %898 = vmatmul.bf16.gmra.mxu0 %v782
        %v899 = vpop.f32.mrf.mxu0
        %v900 = vadd.f32 0.0, %v899
        %v901 = vpop.f32.mrf.mxu0
        %v902 = vadd.f32 0.0, %v901
        %903 = vmatmul.bf16.gmra.mxu0 %v783
        %v904 = vpop.f32.mrf.mxu0
        %v905 = vadd.f32 0.0, %v904
        %v906 = vpop.f32.mrf.mxu0
        %v907 = vadd.f32 0.0, %v906
        %908 = vmatmul.bf16.gmra.mxu0 %v784
        %v909 = vpop.f32.mrf.mxu0
        %v910 = vadd.f32 0.0, %v909
        %v911 = vpop.f32.mrf.mxu0
        %v912 = vadd.f32 0.0, %v911
        %913 = vmatmul.bf16.gmra.mxu0 %v785
        %v914 = vpop.f32.mrf.mxu0
        %v915 = vadd.f32 0.0, %v914
        %v916 = vpop.f32.mrf.mxu0
        %v917 = vadd.f32 0.0, %v916
        %918 = vmatmul.bf16.gmra.mxu0 %v786
        %v919 = vpop.f32.mrf.mxu0
        %v920 = vadd.f32 0.0, %v919
        %v921 = vpop.f32.mrf.mxu0
        %v922 = vadd.f32 0.0, %v921
        %923 = vmatmul.bf16.gmra.mxu0 %v787
        %v924 = vpop.f32.mrf.mxu0
        %v925 = vadd.f32 0.0, %v924
        %v926 = vpop.f32.mrf.mxu0
        %v927 = vadd.f32 0.0, %v926
        %928 = vmatmul.bf16.gmra.mxu0 %v788
        %v929 = vpop.f32.mrf.mxu0
        %v930 = vadd.f32 0.0, %v929
        %v931 = vpop.f32.mrf.mxu0
        %v932 = vadd.f32 0.0, %v931
        %933 = vmatmul.bf16.gmra.mxu0 %v789
        %v934 = vpop.f32.mrf.mxu0
        %v935 = vadd.f32 0.0, %v934
        %v936 = vpop.f32.mrf.mxu0
        %v937 = vadd.f32 0.0, %v936
        %938 = vmatmul.bf16.gmra.mxu0 %v790
        %v939 = vpop.f32.mrf.mxu0
        %v940 = vadd.f32 0.0, %v939
        %v941 = vpop.f32.mrf.mxu0
        %v942 = vadd.f32 0.0, %v941
        %943 = vdwg.mxu0
        %v944 = vadd.f32 %v583, %v865
        %v945 = vadd.f32 %v585, %v867
        %v946 = vadd.f32 %v588, %v870
        %v947 = vadd.f32 %v590, %v872
        %v948 = vadd.f32 %v593, %v875
        %v949 = vadd.f32 %v595, %v877
        %v950 = vadd.f32 %v598, %v880
        %v951 = vadd.f32 %v600, %v882
        %v952 = vadd.f32 %v603, %v885
        %v953 = vadd.f32 %v605, %v887
        %v954 = vadd.f32 %v608, %v890
        %v955 = vadd.f32 %v610, %v892
        %v956 = vadd.f32 %v613, %v895
        %v957 = vadd.f32 %v615, %v897
        %v958 = vadd.f32 %v618, %v900
        %v959 = vadd.f32 %v620, %v902
        %v960 = vadd.f32 %v623, %v905
        %v961 = vadd.f32 %v625, %v907
        %v962 = vadd.f32 %v628, %v910
        %v963 = vadd.f32 %v630, %v912
        %v964 = vadd.f32 %v633, %v915
        %v965 = vadd.f32 %v635, %v917
        %v966 = vadd.f32 %v638, %v920
        %v967 = vadd.f32 %v640, %v922
        %v968 = vadd.f32 %v643, %v925
        %v969 = vadd.f32 %v645, %v927
        %v970 = vadd.f32 %v648, %v930
        %v971 = vadd.f32 %v650, %v932
        %v972 = vadd.f32 %v653, %v935
        %v973 = vadd.f32 %v655, %v937
        %v974 = vadd.f32 %v658, %v940
        %v975 = vadd.f32 %v660, %v942
        %v976 = vld [vmem:[%s185 + $0x18] sm:$0xf]
        %v977 = vld [vmem:[%s185 + $0x1c] sm:$0xf]
        %v978 = vld [vmem:[%s185 + $0x20] sm:$0xf]
        %v979 = vld [vmem:[%s185 + $0x24] sm:$0xf]
        %v980 = vld [vmem:[%s185 + $0x28] sm:$0xf]
        %v981 = vld [vmem:[%s185 + $0x2c] sm:$0xf]
        %v982 = vld [vmem:[%s185 + $0x30] sm:$0xf]
        %v983 = vld [vmem:[%s185 + $0x34] sm:$0xf]
        %v984 = vld [vmem:[%s185 + $0x38] sm:$0xf]
        %v985 = vld [vmem:[%s185 + $0x3c] sm:$0xf]
        %v986 = vld [vmem:[%s185 + $0x40] sm:$0xf]
        %v987 = vld [vmem:[%s185 + $0x44] sm:$0xf]
        %v988 = vld [vmem:[%s185 + $0x48] sm:$0xf]
        %v989 = vld [vmem:[%s185 + $0x4c] sm:$0xf]
        %v990 = vld [vmem:[%s185 + $0x50] sm:$0xf]
        %v991 = vld [vmem:[%s185 + $0x54] sm:$0xf]
        %v992 = vld [vmem:[%s185 + $0x58] sm:$0xf]
        %v993 = vld [vmem:[%s185 + $0x5c] sm:$0xf]
        %v994 = vld [vmem:[%s185 + $0x60] sm:$0xf]
        %v995 = vld [vmem:[%s185 + $0x64] sm:$0xf]
        %v996 = vld [vmem:[%s185 + $0x68] sm:$0xf]
        %v997 = vld [vmem:[%s185 + $0x6c] sm:$0xf]
        %v998 = vld [vmem:[%s185 + $0x70] sm:$0xf]
        %v999 = vld [vmem:[%s185 + $0x74] sm:$0xf]
        %v1000 = vld [vmem:[%s185 + $0x78] sm:$0xf]
        %v1001 = vld [vmem:[%s185 + $0x7c] sm:$0xf]
        %v1002 = vld [vmem:[%s185 + $0x80] sm:$0xf]
        %v1003 = vld [vmem:[%s185 + $0x84] sm:$0xf]
        %v1004 = vld [vmem:[%s185 + $0x88] sm:$0xf]
        %v1005 = vld [vmem:[%s185 + $0x8c] sm:$0xf]
        %v1006 = vld [vmem:[%s185 + $0x90] sm:$0xf]
        %v1007 = vld [vmem:[%s185 + $0x94] sm:$0xf]
        %s1008 = scalar_lea.vmem [#allocation5], 192
        %v1009 = vld [vmem:[%s1008] sm:$0xf]
        %v1010 = vld [vmem:[%s1008 + $0x4] sm:$0xf]
        %v1011 = vld [vmem:[%s1008 + $0x8] sm:$0xf]
        %v1012 = vld [vmem:[%s1008 + $0xc] sm:$0xf]
        %v1013 = vld [vmem:[%s1008 + $0x10] sm:$0xf]
        %v1014 = vld [vmem:[%s1008 + $0x14] sm:$0xf]
        %v1015 = vld [vmem:[%s1008 + $0x18] sm:$0xf]
        %v1016 = vld [vmem:[%s1008 + $0x1c] sm:$0xf]
        %v1017 = vld [vmem:[%s1008 + $0x20] sm:$0xf]
        %v1018 = vld [vmem:[%s1008 + $0x24] sm:$0xf]
        %v1019 = vld [vmem:[%s1008 + $0x28] sm:$0xf]
        %v1020 = vld [vmem:[%s1008 + $0x2c] sm:$0xf]
        %v1021 = vld [vmem:[%s1008 + $0x30] sm:$0xf]
        %v1022 = vld [vmem:[%s1008 + $0x34] sm:$0xf]
        %v1023 = vld [vmem:[%s1008 + $0x38] sm:$0xf]
        %v1024 = vld [vmem:[%s1008 + $0x3c] sm:$0xf]
        %v1057 = vunpack.c.l.b16 %v976
        %v1058 = vunpack.c.l.b16 %v977
        %v1059 = vunpack.c.l.b16 %v978
        %v1060 = vunpack.c.l.b16 %v979
        %v1061 = vunpack.c.l.b16 %v980
        %v1062 = vunpack.c.l.b16 %v981
        %v1063 = vunpack.c.l.b16 %v982
        %v1064 = vunpack.c.l.b16 %v983
        %v1065 = vunpack.c.l.b16 %v984
        %v1066 = vunpack.c.l.b16 %v985
        %v1067 = vunpack.c.l.b16 %v986
        %v1068 = vunpack.c.l.b16 %v987
        %v1069 = vunpack.c.l.b16 %v988
        %v1070 = vunpack.c.l.b16 %v989
        %v1071 = vunpack.c.l.b16 %v990
        %v1072 = vunpack.c.l.b16 %v991
        %v1073 = vunpack.c.l.b16 %v992
        %v1074 = vunpack.c.l.b16 %v993
        %v1075 = vunpack.c.l.b16 %v994
        %v1076 = vunpack.c.l.b16 %v995
        %v1077 = vunpack.c.l.b16 %v996
        %v1078 = vunpack.c.l.b16 %v997
        %v1079 = vunpack.c.l.b16 %v998
        %v1080 = vunpack.c.l.b16 %v999
        %v1081 = vunpack.c.l.b16 %v1000
        %v1082 = vunpack.c.l.b16 %v1001
        %v1083 = vunpack.c.l.b16 %v1002
        %v1084 = vunpack.c.l.b16 %v1003
        %v1085 = vunpack.c.l.b16 %v1004
        %v1086 = vunpack.c.l.b16 %v1005
        %v1087 = vunpack.c.l.b16 %v1006
        %v1088 = vunpack.c.l.b16 %v1007
        %v1089 = vpack.c.b16 %v1058, %v1057
        %v1090 = vpack.c.b16 %v1060, %v1059
        %v1091 = vpack.c.b16 %v1062, %v1061
        %v1092 = vpack.c.b16 %v1064, %v1063
        %v1093 = vpack.c.b16 %v1066, %v1065
        %v1094 = vpack.c.b16 %v1068, %v1067
        %v1095 = vpack.c.b16 %v1070, %v1069
        %v1096 = vpack.c.b16 %v1072, %v1071
        %v1097 = vpack.c.b16 %v1074, %v1073
        %v1098 = vpack.c.b16 %v1076, %v1075
        %v1099 = vpack.c.b16 %v1078, %v1077
        %v1100 = vpack.c.b16 %v1080, %v1079
        %v1101 = vpack.c.b16 %v1082, %v1081
        %v1102 = vpack.c.b16 %v1084, %v1083
        %v1103 = vpack.c.b16 %v1086, %v1085
        %v1104 = vpack.c.b16 %v1088, %v1087
        %v1137 = vunpack.c.l.b16 %v1009
        %v1138 = vunpack.c.l.b16 %v1010
        %v1139 = vunpack.c.l.b16 %v1011
        %v1140 = vunpack.c.l.b16 %v1012
        %v1141 = vunpack.c.l.b16 %v1013
        %v1142 = vunpack.c.l.b16 %v1014
        %v1143 = vunpack.c.l.b16 %v1015
        %v1144 = vunpack.c.l.b16 %v1016
        %v1145 = vunpack.c.l.b16 %v1017
        %v1146 = vunpack.c.l.b16 %v1018
        %v1147 = vunpack.c.l.b16 %v1019
        %v1148 = vunpack.c.l.b16 %v1020
        %v1149 = vunpack.c.l.b16 %v1021
        %v1150 = vunpack.c.l.b16 %v1022
        %v1151 = vunpack.c.l.b16 %v1023
        %v1152 = vunpack.c.l.b16 %v1024
        %v1153 = vpack.c.b16 %v1138, %v1137
        %v1154 = vpack.c.b16 %v1140, %v1139
        %v1155 = vpack.c.b16 %v1142, %v1141
        %v1156 = vpack.c.b16 %v1144, %v1143
        %v1157 = vpack.c.b16 %v1146, %v1145
        %v1158 = vpack.c.b16 %v1148, %v1147
        %v1159 = vpack.c.b16 %v1150, %v1149
        %v1160 = vpack.c.b16 %v1152, %v1151
        %1169 = vmatpush.bf16.msra.mxu0 %v1160
        %1170 = vmatpush.bf16.msra.mxu0 %v1159
        %1171 = vmatpush.bf16.msra.mxu0 %v1158
        %1172 = vmatpush.bf16.msra.mxu0 %v1157
        %1173 = vmatpush.bf16.msra.mxu0 %v1156
        %1174 = vmatpush.bf16.msra.mxu0 %v1155
        %1175 = vmatpush.bf16.msra.mxu0 %v1154
        %1176 = vmatpush.bf16.msra.mxu0 %v1153
        %1177 = vmatmul.bf16.gmra.mxu0 %v1089
        %v1178 = vpop.f32.mrf.mxu0
        %v1179 = vadd.f32 0.0, %v1178
        %v1180 = vpop.f32.mrf.mxu0
        %v1181 = vadd.f32 0.0, %v1180
        %1182 = vmatmul.bf16.gmra.mxu0 %v1090
        %v1183 = vpop.f32.mrf.mxu0
        %v1184 = vadd.f32 0.0, %v1183
        %v1185 = vpop.f32.mrf.mxu0
        %v1186 = vadd.f32 0.0, %v1185
        %1187 = vmatmul.bf16.gmra.mxu0 %v1091
        %v1188 = vpop.f32.mrf.mxu0
        %v1189 = vadd.f32 0.0, %v1188
        %v1190 = vpop.f32.mrf.mxu0
        %v1191 = vadd.f32 0.0, %v1190
        %1192 = vmatmul.bf16.gmra.mxu0 %v1092
        %v1193 = vpop.f32.mrf.mxu0
        %v1194 = vadd.f32 0.0, %v1193
        %v1195 = vpop.f32.mrf.mxu0
        %v1196 = vadd.f32 0.0, %v1195
        %1197 = vmatmul.bf16.gmra.mxu0 %v1093
        %v1198 = vpop.f32.mrf.mxu0
        %v1199 = vadd.f32 0.0, %v1198
        %v1200 = vpop.f32.mrf.mxu0
        %v1201 = vadd.f32 0.0, %v1200
        %1202 = vmatmul.bf16.gmra.mxu0 %v1094
        %v1203 = vpop.f32.mrf.mxu0
        %v1204 = vadd.f32 0.0, %v1203
        %v1205 = vpop.f32.mrf.mxu0
        %v1206 = vadd.f32 0.0, %v1205
        %1207 = vmatmul.bf16.gmra.mxu0 %v1095
        %v1208 = vpop.f32.mrf.mxu0
        %v1209 = vadd.f32 0.0, %v1208
        %v1210 = vpop.f32.mrf.mxu0
        %v1211 = vadd.f32 0.0, %v1210
        %1212 = vmatmul.bf16.gmra.mxu0 %v1096
        %v1213 = vpop.f32.mrf.mxu0
        %v1214 = vadd.f32 0.0, %v1213
        %v1215 = vpop.f32.mrf.mxu0
        %v1216 = vadd.f32 0.0, %v1215
        %1217 = vmatmul.bf16.gmra.mxu0 %v1097
        %v1218 = vpop.f32.mrf.mxu0
        %v1219 = vadd.f32 0.0, %v1218
        %v1220 = vpop.f32.mrf.mxu0
        %v1221 = vadd.f32 0.0, %v1220
        %1222 = vmatmul.bf16.gmra.mxu0 %v1098
        %v1223 = vpop.f32.mrf.mxu0
        %v1224 = vadd.f32 0.0, %v1223
        %v1225 = vpop.f32.mrf.mxu0
        %v1226 = vadd.f32 0.0, %v1225
        %1227 = vmatmul.bf16.gmra.mxu0 %v1099
        %v1228 = vpop.f32.mrf.mxu0
        %v1229 = vadd.f32 0.0, %v1228
        %v1230 = vpop.f32.mrf.mxu0
        %v1231 = vadd.f32 0.0, %v1230
        %1232 = vmatmul.bf16.gmra.mxu0 %v1100
        %v1233 = vpop.f32.mrf.mxu0
        %v1234 = vadd.f32 0.0, %v1233
        %v1235 = vpop.f32.mrf.mxu0
        %v1236 = vadd.f32 0.0, %v1235
        %1237 = vmatmul.bf16.gmra.mxu0 %v1101
        %v1238 = vpop.f32.mrf.mxu0
        %v1239 = vadd.f32 0.0, %v1238
        %v1240 = vpop.f32.mrf.mxu0
        %v1241 = vadd.f32 0.0, %v1240
        %1242 = vmatmul.bf16.gmra.mxu0 %v1102
        %v1243 = vpop.f32.mrf.mxu0
        %v1244 = vadd.f32 0.0, %v1243
        %v1245 = vpop.f32.mrf.mxu0
        %v1246 = vadd.f32 0.0, %v1245
        %1247 = vmatmul.bf16.gmra.mxu0 %v1103
        %v1248 = vpop.f32.mrf.mxu0
        %v1249 = vadd.f32 0.0, %v1248
        %v1250 = vpop.f32.mrf.mxu0
        %v1251 = vadd.f32 0.0, %v1250
        %1252 = vmatmul.bf16.gmra.mxu0 %v1104
        %v1253 = vpop.f32.mrf.mxu0
        %v1254 = vadd.f32 0.0, %v1253
        %v1255 = vpop.f32.mrf.mxu0
        %v1256 = vadd.f32 0.0, %v1255
        %1257 = vdwg.mxu0
        %v1258 = vadd.f32 %v944, %v1179
        %v1259 = vadd.f32 %v945, %v1181
        %v1260 = vadd.f32 %v946, %v1184
        %v1261 = vadd.f32 %v947, %v1186
        %v1262 = vadd.f32 %v948, %v1189
        %v1263 = vadd.f32 %v949, %v1191
        %v1264 = vadd.f32 %v950, %v1194
        %v1265 = vadd.f32 %v951, %v1196
        %v1266 = vadd.f32 %v952, %v1199
        %v1267 = vadd.f32 %v953, %v1201
        %v1268 = vadd.f32 %v954, %v1204
        %v1269 = vadd.f32 %v955, %v1206
        %v1270 = vadd.f32 %v956, %v1209
        %v1271 = vadd.f32 %v957, %v1211
        %v1272 = vadd.f32 %v958, %v1214
        %v1273 = vadd.f32 %v959, %v1216
        %v1274 = vadd.f32 %v960, %v1219
        %v1275 = vadd.f32 %v961, %v1221
        %v1276 = vadd.f32 %v962, %v1224
        %v1277 = vadd.f32 %v963, %v1226
        %v1278 = vadd.f32 %v964, %v1229
        %v1279 = vadd.f32 %v965, %v1231
        %v1280 = vadd.f32 %v966, %v1234
        %v1281 = vadd.f32 %v967, %v1236
        %v1282 = vadd.f32 %v968, %v1239
        %v1283 = vadd.f32 %v969, %v1241
        %v1284 = vadd.f32 %v970, %v1244
        %v1285 = vadd.f32 %v971, %v1246
        %v1286 = vadd.f32 %v972, %v1249
        %v1287 = vadd.f32 %v973, %v1251
        %v1288 = vadd.f32 %v974, %v1254
        %v1289 = vadd.f32 %v975, %v1256
        %v1290 = vld [vmem:[%s185 + $0x20] sm:$0xf]
        %v1291 = vld [vmem:[%s185 + $0x24] sm:$0xf]
        %v1292 = vld [vmem:[%s185 + $0x28] sm:$0xf]
        %v1293 = vld [vmem:[%s185 + $0x2c] sm:$0xf]
        %v1294 = vld [vmem:[%s185 + $0x30] sm:$0xf]
        %v1295 = vld [vmem:[%s185 + $0x34] sm:$0xf]
        %v1296 = vld [vmem:[%s185 + $0x38] sm:$0xf]
        %v1297 = vld [vmem:[%s185 + $0x3c] sm:$0xf]
        %v1298 = vld [vmem:[%s185 + $0x40] sm:$0xf]
        %v1299 = vld [vmem:[%s185 + $0x44] sm:$0xf]
        %v1300 = vld [vmem:[%s185 + $0x48] sm:$0xf]
        %v1301 = vld [vmem:[%s185 + $0x4c] sm:$0xf]
        %v1302 = vld [vmem:[%s185 + $0x50] sm:$0xf]
        %v1303 = vld [vmem:[%s185 + $0x54] sm:$0xf]
        %v1304 = vld [vmem:[%s185 + $0x58] sm:$0xf]
        %v1305 = vld [vmem:[%s185 + $0x5c] sm:$0xf]
        %v1306 = vld [vmem:[%s185 + $0x60] sm:$0xf]
        %v1307 = vld [vmem:[%s185 + $0x64] sm:$0xf]
        %v1308 = vld [vmem:[%s185 + $0x68] sm:$0xf]
        %v1309 = vld [vmem:[%s185 + $0x6c] sm:$0xf]
        %v1310 = vld [vmem:[%s185 + $0x70] sm:$0xf]
        %v1311 = vld [vmem:[%s185 + $0x74] sm:$0xf]
        %v1312 = vld [vmem:[%s185 + $0x78] sm:$0xf]
        %v1313 = vld [vmem:[%s185 + $0x7c] sm:$0xf]
        %v1314 = vld [vmem:[%s185 + $0x80] sm:$0xf]
        %v1315 = vld [vmem:[%s185 + $0x84] sm:$0xf]
        %v1316 = vld [vmem:[%s185 + $0x88] sm:$0xf]
        %v1317 = vld [vmem:[%s185 + $0x8c] sm:$0xf]
        %v1318 = vld [vmem:[%s185 + $0x90] sm:$0xf]
        %v1319 = vld [vmem:[%s185 + $0x94] sm:$0xf]
        %v1320 = vld [vmem:[%s185 + $0x98] sm:$0xf]
        %v1321 = vld [vmem:[%s185 + $0x9c] sm:$0xf]
        %s1322 = scalar_lea.vmem [#allocation5], 256
        %v1323 = vld [vmem:[%s1322] sm:$0xf]
        %v1324 = vld [vmem:[%s1322 + $0x4] sm:$0xf]
        %v1325 = vld [vmem:[%s1322 + $0x8] sm:$0xf]
        %v1326 = vld [vmem:[%s1322 + $0xc] sm:$0xf]
        %v1327 = vld [vmem:[%s1322 + $0x10] sm:$0xf]
        %v1328 = vld [vmem:[%s1322 + $0x14] sm:$0xf]
        %v1329 = vld [vmem:[%s1322 + $0x18] sm:$0xf]
        %v1330 = vld [vmem:[%s1322 + $0x1c] sm:$0xf]
        %v1331 = vld [vmem:[%s1322 + $0x20] sm:$0xf]
        %v1332 = vld [vmem:[%s1322 + $0x24] sm:$0xf]
        %v1333 = vld [vmem:[%s1322 + $0x28] sm:$0xf]
        %v1334 = vld [vmem:[%s1322 + $0x2c] sm:$0xf]
        %v1335 = vld [vmem:[%s1322 + $0x30] sm:$0xf]
        %v1336 = vld [vmem:[%s1322 + $0x34] sm:$0xf]
        %v1337 = vld [vmem:[%s1322 + $0x38] sm:$0xf]
        %v1338 = vld [vmem:[%s1322 + $0x3c] sm:$0xf]
        %v1371 = vunpack.c.l.b16 %v1290
        %v1372 = vunpack.c.l.b16 %v1291
        %v1373 = vunpack.c.l.b16 %v1292
        %v1374 = vunpack.c.l.b16 %v1293
        %v1375 = vunpack.c.l.b16 %v1294
        %v1376 = vunpack.c.l.b16 %v1295
        %v1377 = vunpack.c.l.b16 %v1296
        %v1378 = vunpack.c.l.b16 %v1297
        %v1379 = vunpack.c.l.b16 %v1298
        %v1380 = vunpack.c.l.b16 %v1299
        %v1381 = vunpack.c.l.b16 %v1300
        %v1382 = vunpack.c.l.b16 %v1301
        %v1383 = vunpack.c.l.b16 %v1302
        %v1384 = vunpack.c.l.b16 %v1303
        %v1385 = vunpack.c.l.b16 %v1304
        %v1386 = vunpack.c.l.b16 %v1305
        %v1387 = vunpack.c.l.b16 %v1306
        %v1388 = vunpack.c.l.b16 %v1307
        %v1389 = vunpack.c.l.b16 %v1308
        %v1390 = vunpack.c.l.b16 %v1309
        %v1391 = vunpack.c.l.b16 %v1310
        %v1392 = vunpack.c.l.b16 %v1311
        %v1393 = vunpack.c.l.b16 %v1312
        %v1394 = vunpack.c.l.b16 %v1313
        %v1395 = vunpack.c.l.b16 %v1314
        %v1396 = vunpack.c.l.b16 %v1315
        %v1397 = vunpack.c.l.b16 %v1316
        %v1398 = vunpack.c.l.b16 %v1317
        %v1399 = vunpack.c.l.b16 %v1318
        %v1400 = vunpack.c.l.b16 %v1319
        %v1401 = vunpack.c.l.b16 %v1320
        %v1402 = vunpack.c.l.b16 %v1321
        %v1403 = vpack.c.b16 %v1372, %v1371
        %v1404 = vpack.c.b16 %v1374, %v1373
        %v1405 = vpack.c.b16 %v1376, %v1375
        %v1406 = vpack.c.b16 %v1378, %v1377
        %v1407 = vpack.c.b16 %v1380, %v1379
        %v1408 = vpack.c.b16 %v1382, %v1381
        %v1409 = vpack.c.b16 %v1384, %v1383
        %v1410 = vpack.c.b16 %v1386, %v1385
        %v1411 = vpack.c.b16 %v1388, %v1387
        %v1412 = vpack.c.b16 %v1390, %v1389
        %v1413 = vpack.c.b16 %v1392, %v1391
        %v1414 = vpack.c.b16 %v1394, %v1393
        %v1415 = vpack.c.b16 %v1396, %v1395
        %v1416 = vpack.c.b16 %v1398, %v1397
        %v1417 = vpack.c.b16 %v1400, %v1399
        %v1418 = vpack.c.b16 %v1402, %v1401
        %v1451 = vunpack.c.l.b16 %v1323
        %v1452 = vunpack.c.l.b16 %v1324
        %v1453 = vunpack.c.l.b16 %v1325
        %v1454 = vunpack.c.l.b16 %v1326
        %v1455 = vunpack.c.l.b16 %v1327
        %v1456 = vunpack.c.l.b16 %v1328
        %v1457 = vunpack.c.l.b16 %v1329
        %v1458 = vunpack.c.l.b16 %v1330
        %v1459 = vunpack.c.l.b16 %v1331
        %v1460 = vunpack.c.l.b16 %v1332
        %v1461 = vunpack.c.l.b16 %v1333
        %v1462 = vunpack.c.l.b16 %v1334
        %v1463 = vunpack.c.l.b16 %v1335
        %v1464 = vunpack.c.l.b16 %v1336
        %v1465 = vunpack.c.l.b16 %v1337
        %v1466 = vunpack.c.l.b16 %v1338
        %v1467 = vpack.c.b16 %v1452, %v1451
        %v1468 = vpack.c.b16 %v1454, %v1453
        %v1469 = vpack.c.b16 %v1456, %v1455
        %v1470 = vpack.c.b16 %v1458, %v1457
        %v1471 = vpack.c.b16 %v1460, %v1459
        %v1472 = vpack.c.b16 %v1462, %v1461
        %v1473 = vpack.c.b16 %v1464, %v1463
        %v1474 = vpack.c.b16 %v1466, %v1465
        %1483 = vmatpush.bf16.msra.mxu0 %v1474
        %1484 = vmatpush.bf16.msra.mxu0 %v1473
        %1485 = vmatpush.bf16.msra.mxu0 %v1472
        %1486 = vmatpush.bf16.msra.mxu0 %v1471
        %1487 = vmatpush.bf16.msra.mxu0 %v1470
        %1488 = vmatpush.bf16.msra.mxu0 %v1469
        %1489 = vmatpush.bf16.msra.mxu0 %v1468
        %1490 = vmatpush.bf16.msra.mxu0 %v1467
        %1491 = vmatmul.bf16.gmra.mxu0 %v1403
        %v1492 = vpop.f32.mrf.mxu0
        %v1493 = vadd.f32 0.0, %v1492
        %v1494 = vpop.f32.mrf.mxu0
        %v1495 = vadd.f32 0.0, %v1494
        %1496 = vmatmul.bf16.gmra.mxu0 %v1404
        %v1497 = vpop.f32.mrf.mxu0
        %v1498 = vadd.f32 0.0, %v1497
        %v1499 = vpop.f32.mrf.mxu0
        %v1500 = vadd.f32 0.0, %v1499
        %1501 = vmatmul.bf16.gmra.mxu0 %v1405
        %v1502 = vpop.f32.mrf.mxu0
        %v1503 = vadd.f32 0.0, %v1502
        %v1504 = vpop.f32.mrf.mxu0
        %v1505 = vadd.f32 0.0, %v1504
        %1506 = vmatmul.bf16.gmra.mxu0 %v1406
        %v1507 = vpop.f32.mrf.mxu0
        %v1508 = vadd.f32 0.0, %v1507
        %v1509 = vpop.f32.mrf.mxu0
        %v1510 = vadd.f32 0.0, %v1509
        %1511 = vmatmul.bf16.gmra.mxu0 %v1407
        %v1512 = vpop.f32.mrf.mxu0
        %v1513 = vadd.f32 0.0, %v1512
        %v1514 = vpop.f32.mrf.mxu0
        %v1515 = vadd.f32 0.0, %v1514
        %1516 = vmatmul.bf16.gmra.mxu0 %v1408
        %v1517 = vpop.f32.mrf.mxu0
        %v1518 = vadd.f32 0.0, %v1517
        %v1519 = vpop.f32.mrf.mxu0
        %v1520 = vadd.f32 0.0, %v1519
        %1521 = vmatmul.bf16.gmra.mxu0 %v1409
        %v1522 = vpop.f32.mrf.mxu0
        %v1523 = vadd.f32 0.0, %v1522
        %v1524 = vpop.f32.mrf.mxu0
        %v1525 = vadd.f32 0.0, %v1524
        %1526 = vmatmul.bf16.gmra.mxu0 %v1410
        %v1527 = vpop.f32.mrf.mxu0
        %v1528 = vadd.f32 0.0, %v1527
        %v1529 = vpop.f32.mrf.mxu0
        %v1530 = vadd.f32 0.0, %v1529
        %1531 = vmatmul.bf16.gmra.mxu0 %v1411
        %v1532 = vpop.f32.mrf.mxu0
        %v1533 = vadd.f32 0.0, %v1532
        %v1534 = vpop.f32.mrf.mxu0
        %v1535 = vadd.f32 0.0, %v1534
        %1536 = vmatmul.bf16.gmra.mxu0 %v1412
        %v1537 = vpop.f32.mrf.mxu0
        %v1538 = vadd.f32 0.0, %v1537
        %v1539 = vpop.f32.mrf.mxu0
        %v1540 = vadd.f32 0.0, %v1539
        %1541 = vmatmul.bf16.gmra.mxu0 %v1413
        %v1542 = vpop.f32.mrf.mxu0
        %v1543 = vadd.f32 0.0, %v1542
        %v1544 = vpop.f32.mrf.mxu0
        %v1545 = vadd.f32 0.0, %v1544
        %1546 = vmatmul.bf16.gmra.mxu0 %v1414
        %v1547 = vpop.f32.mrf.mxu0
        %v1548 = vadd.f32 0.0, %v1547
        %v1549 = vpop.f32.mrf.mxu0
        %v1550 = vadd.f32 0.0, %v1549
        %1551 = vmatmul.bf16.gmra.mxu0 %v1415
        %v1552 = vpop.f32.mrf.mxu0
        %v1553 = vadd.f32 0.0, %v1552
        %v1554 = vpop.f32.mrf.mxu0
        %v1555 = vadd.f32 0.0, %v1554
        %1556 = vmatmul.bf16.gmra.mxu0 %v1416
        %v1557 = vpop.f32.mrf.mxu0
        %v1558 = vadd.f32 0.0, %v1557
        %v1559 = vpop.f32.mrf.mxu0
        %v1560 = vadd.f32 0.0, %v1559
        %1561 = vmatmul.bf16.gmra.mxu0 %v1417
        %v1562 = vpop.f32.mrf.mxu0
        %v1563 = vadd.f32 0.0, %v1562
        %v1564 = vpop.f32.mrf.mxu0
        %v1565 = vadd.f32 0.0, %v1564
        %1566 = vmatmul.bf16.gmra.mxu0 %v1418
        %v1567 = vpop.f32.mrf.mxu0
        %v1568 = vadd.f32 0.0, %v1567
        %v1569 = vpop.f32.mrf.mxu0
        %v1570 = vadd.f32 0.0, %v1569
        %1571 = vdwg.mxu0
        %v1572 = vadd.f32 %v1258, %v1493
        %v1573 = vadd.f32 %v1259, %v1495
        %v1574 = vadd.f32 %v1260, %v1498
        %v1575 = vadd.f32 %v1261, %v1500
        %v1576 = vadd.f32 %v1262, %v1503
        %v1577 = vadd.f32 %v1263, %v1505
        %v1578 = vadd.f32 %v1264, %v1508
        %v1579 = vadd.f32 %v1265, %v1510
        %v1580 = vadd.f32 %v1266, %v1513
        %v1581 = vadd.f32 %v1267, %v1515
        %v1582 = vadd.f32 %v1268, %v1518
        %v1583 = vadd.f32 %v1269, %v1520
        %v1584 = vadd.f32 %v1270, %v1523
        %v1585 = vadd.f32 %v1271, %v1525
        %v1586 = vadd.f32 %v1272, %v1528
        %v1587 = vadd.f32 %v1273, %v1530
        %v1588 = vadd.f32 %v1274, %v1533
        %v1589 = vadd.f32 %v1275, %v1535
        %v1590 = vadd.f32 %v1276, %v1538
        %v1591 = vadd.f32 %v1277, %v1540
        %v1592 = vadd.f32 %v1278, %v1543
        %v1593 = vadd.f32 %v1279, %v1545
        %v1594 = vadd.f32 %v1280, %v1548
        %v1595 = vadd.f32 %v1281, %v1550
        %v1596 = vadd.f32 %v1282, %v1553
        %v1597 = vadd.f32 %v1283, %v1555
        %v1598 = vadd.f32 %v1284, %v1558
        %v1599 = vadd.f32 %v1285, %v1560
        %v1600 = vadd.f32 %v1286, %v1563
        %v1601 = vadd.f32 %v1287, %v1565
        %v1602 = vadd.f32 %v1288, %v1568
        %v1603 = vadd.f32 %v1289, %v1570
        %v1604 = vpack.c.bf16 %v1572, %v1572
        %v1605 = vpack.c.bf16 %v1573, %v1573
        %v1606 = vpack.c.bf16 %v1574, %v1574
        %v1607 = vpack.c.bf16 %v1575, %v1575
        %v1608 = vpack.c.bf16 %v1576, %v1576
        %v1609 = vpack.c.bf16 %v1577, %v1577
        %v1610 = vpack.c.bf16 %v1578, %v1578
        %v1611 = vpack.c.bf16 %v1579, %v1579
        %v1612 = vpack.c.bf16 %v1580, %v1580
        %v1613 = vpack.c.bf16 %v1581, %v1581
        %v1614 = vpack.c.bf16 %v1582, %v1582
        %v1615 = vpack.c.bf16 %v1583, %v1583
        %v1616 = vpack.c.bf16 %v1584, %v1584
        %v1617 = vpack.c.bf16 %v1585, %v1585
        %v1618 = vpack.c.bf16 %v1586, %v1586
        %v1619 = vpack.c.bf16 %v1587, %v1587
        %v1620 = vpack.c.bf16 %v1588, %v1588
        %v1621 = vpack.c.bf16 %v1589, %v1589
        %v1622 = vpack.c.bf16 %v1590, %v1590
        %v1623 = vpack.c.bf16 %v1591, %v1591
        %v1624 = vpack.c.bf16 %v1592, %v1592
        %v1625 = vpack.c.bf16 %v1593, %v1593
        %v1626 = vpack.c.bf16 %v1594, %v1594
        %v1627 = vpack.c.bf16 %v1595, %v1595
        %v1628 = vpack.c.bf16 %v1596, %v1596
        %v1629 = vpack.c.bf16 %v1597, %v1597
        %v1630 = vpack.c.bf16 %v1598, %v1598
        %v1631 = vpack.c.bf16 %v1599, %v1599
        %v1632 = vpack.c.bf16 %v1600, %v1600
        %v1633 = vpack.c.bf16 %v1601, %v1601
        %v1634 = vpack.c.bf16 %v1602, %v1602
        %v1635 = vpack.c.bf16 %v1603, %v1603
        %1636 = vst [vmem:[%s211] sm:$0xf] %v1604
        %1637 = vst [vmem:[%s211 + $0x4] sm:$0xf] %v1605
        %1638 = vst [vmem:[%s211 + $0x8] sm:$0xf] %v1606
        %1639 = vst [vmem:[%s211 + $0xc] sm:$0xf] %v1607
        %1640 = vst [vmem:[%s211 + $0x10] sm:$0xf] %v1608
        %1641 = vst [vmem:[%s211 + $0x14] sm:$0xf] %v1609
        %1642 = vst [vmem:[%s211 + $0x18] sm:$0xf] %v1610
        %1643 = vst [vmem:[%s211 + $0x1c] sm:$0xf] %v1611
        %1644 = vst [vmem:[%s211 + $0x20] sm:$0xf] %v1612
        %1645 = vst [vmem:[%s211 + $0x24] sm:$0xf] %v1613
        %1646 = vst [vmem:[%s211 + $0x28] sm:$0xf] %v1614
        %1647 = vst [vmem:[%s211 + $0x2c] sm:$0xf] %v1615
        %1648 = vst [vmem:[%s211 + $0x30] sm:$0xf] %v1616
        %1649 = vst [vmem:[%s211 + $0x34] sm:$0xf] %v1617
        %1650 = vst [vmem:[%s211 + $0x38] sm:$0xf] %v1618
        %1651 = vst [vmem:[%s211 + $0x3c] sm:$0xf] %v1619
        %1652 = vst [vmem:[%s211 + $0x40] sm:$0xf] %v1620
        %1653 = vst [vmem:[%s211 + $0x44] sm:$0xf] %v1621
        %1654 = vst [vmem:[%s211 + $0x48] sm:$0xf] %v1622
        %1655 = vst [vmem:[%s211 + $0x4c] sm:$0xf] %v1623
        %1656 = vst [vmem:[%s211 + $0x50] sm:$0xf] %v1624
        %1657 = vst [vmem:[%s211 + $0x54] sm:$0xf] %v1625
        %1658 = vst [vmem:[%s211 + $0x58] sm:$0xf] %v1626
        %1659 = vst [vmem:[%s211 + $0x5c] sm:$0xf] %v1627
        %1660 = vst [vmem:[%s211 + $0x60] sm:$0xf] %v1628
        %1661 = vst [vmem:[%s211 + $0x64] sm:$0xf] %v1629
        %1662 = vst [vmem:[%s211 + $0x68] sm:$0xf] %v1630
        %1663 = vst [vmem:[%s211 + $0x6c] sm:$0xf] %v1631
        %1664 = vst [vmem:[%s211 + $0x70] sm:$0xf] %v1632
        %1665 = vst [vmem:[%s211 + $0x74] sm:$0xf] %v1633
        %1666 = vst [vmem:[%s211 + $0x78] sm:$0xf] %v1634
        %1667 = vst [vmem:[%s211 + $0x7c] sm:$0xf] %v1635
        %v1668 = vadd.f32 %v1572, %v1573
        %v1669 = vadd.f32 %v1668, %v1574
        %v1670 = vadd.f32 %v1669, %v1575
        %v1671 = vadd.f32 %v1670, %v1576
        %v1672 = vadd.f32 %v1671, %v1577
        %v1673 = vadd.f32 %v1672, %v1578
        %v1674 = vadd.f32 %v1673, %v1579
        %v1675 = vadd.f32 %v1674, %v1580
        %v1676 = vadd.f32 %v1675, %v1581
        %v1677 = vadd.f32 %v1676, %v1582
        %v1678 = vadd.f32 %v1677, %v1583
        %v1679 = vadd.f32 %v1678, %v1584
        %v1680 = vadd.f32 %v1679, %v1585
        %v1681 = vadd.f32 %v1680, %v1586
        %v1682 = vadd.f32 %v1681, %v1587
        %v1683 = vadd.f32 %v1682, %v1588
        %v1684 = vadd.f32 %v1683, %v1589
        %v1685 = vadd.f32 %v1684, %v1590
        %v1686 = vadd.f32 %v1685, %v1591
        %v1687 = vadd.f32 %v1686, %v1592
        %v1688 = vadd.f32 %v1687, %v1593
        %v1689 = vadd.f32 %v1688, %v1594
        %v1690 = vadd.f32 %v1689, %v1595
        %v1691 = vadd.f32 %v1690, %v1596
        %v1692 = vadd.f32 %v1691, %v1597
        %v1693 = vadd.f32 %v1692, %v1598
        %v1694 = vadd.f32 %v1693, %v1599
        %v1695 = vadd.f32 %v1694, %v1600
        %v1696 = vadd.f32 %v1695, %v1601
        %v1697 = vadd.f32 %v1696, %v1602
        %v1698 = vadd.f32 %v1697, %v1603
        %v1699 = vrot.slane %v1698, 4
        %v1700 = vadd.f32 %v1698, %v1699
        %v1701 = vrot.slane %v1700, 2
        %v1702 = vadd.f32 %v1700, %v1701
        %v1703 = vrot.slane %v1702, 1
        %v1704 = vadd.f32 %v1702, %v1703
        %v1705 = vmul.f32 %v1572, %v1572
        %v1706 = vmul.f32 %v1573, %v1573
        %v1707 = vmul.f32 %v1574, %v1574
        %v1708 = vmul.f32 %v1575, %v1575
        %v1709 = vmul.f32 %v1576, %v1576
        %v1710 = vmul.f32 %v1577, %v1577
        %v1711 = vmul.f32 %v1578, %v1578
        %v1712 = vmul.f32 %v1579, %v1579
        %v1713 = vmul.f32 %v1580, %v1580
        %v1714 = vmul.f32 %v1581, %v1581
        %v1715 = vmul.f32 %v1582, %v1582
        %v1716 = vmul.f32 %v1583, %v1583
        %v1717 = vmul.f32 %v1584, %v1584
        %v1718 = vmul.f32 %v1585, %v1585
        %v1719 = vmul.f32 %v1586, %v1586
        %v1720 = vmul.f32 %v1587, %v1587
        %v1721 = vmul.f32 %v1588, %v1588
        %v1722 = vmul.f32 %v1589, %v1589
        %v1723 = vmul.f32 %v1590, %v1590
        %v1724 = vmul.f32 %v1591, %v1591
        %v1725 = vmul.f32 %v1592, %v1592
        %v1726 = vmul.f32 %v1593, %v1593
        %v1727 = vmul.f32 %v1594, %v1594
        %v1728 = vmul.f32 %v1595, %v1595
        %v1729 = vmul.f32 %v1596, %v1596
        %v1730 = vmul.f32 %v1597, %v1597
        %v1731 = vmul.f32 %v1598, %v1598
        %v1732 = vmul.f32 %v1599, %v1599
        %v1733 = vmul.f32 %v1600, %v1600
        %v1734 = vmul.f32 %v1601, %v1601
        %v1735 = vmul.f32 %v1602, %v1602
        %v1736 = vmul.f32 %v1603, %v1603
        %v1737 = vadd.f32 %v1705, %v1706
        %v1738 = vadd.f32 %v1737, %v1707
        %v1739 = vadd.f32 %v1738, %v1708
        %v1740 = vadd.f32 %v1739, %v1709
        %v1741 = vadd.f32 %v1740, %v1710
        %v1742 = vadd.f32 %v1741, %v1711
        %v1743 = vadd.f32 %v1742, %v1712
        %v1744 = vadd.f32 %v1743, %v1713
        %v1745 = vadd.f32 %v1744, %v1714
        %v1746 = vadd.f32 %v1745, %v1715
        %v1747 = vadd.f32 %v1746, %v1716
        %v1748 = vadd.f32 %v1747, %v1717
        %v1749 = vadd.f32 %v1748, %v1718
        %v1750 = vadd.f32 %v1749, %v1719
        %v1751 = vadd.f32 %v1750, %v1720
        %v1752 = vadd.f32 %v1751, %v1721
        %v1753 = vadd.f32 %v1752, %v1722
        %v1754 = vadd.f32 %v1753, %v1723
        %v1755 = vadd.f32 %v1754, %v1724
        %v1756 = vadd.f32 %v1755, %v1725
        %v1757 = vadd.f32 %v1756, %v1726
        %v1758 = vadd.f32 %v1757, %v1727
        %v1759 = vadd.f32 %v1758, %v1728
        %v1760 = vadd.f32 %v1759, %v1729
        %v1761 = vadd.f32 %v1760, %v1730
        %v1762 = vadd.f32 %v1761, %v1731
        %v1763 = vadd.f32 %v1762, %v1732
        %v1764 = vadd.f32 %v1763, %v1733
        %v1765 = vadd.f32 %v1764, %v1734
        %v1766 = vadd.f32 %v1765, %v1735
        %v1767 = vadd.f32 %v1766, %v1736
        %v1768 = vrot.slane %v1767, 4
        %v1769 = vadd.f32 %v1767, %v1768
        %v1770 = vrot.slane %v1769, 2
        %v1771 = vadd.f32 %v1769, %v1770
        %v1772 = vrot.slane %v1771, 1
        %v1773 = vadd.f32 %v1771, %v1772
        %vm1774 = vcmask 1040384
        %v1775 = vsel %vm1774, %v1704, %v1773
        %1776 = vst [vmem:[%s218] sm:$0x3] %v1775
        %s1777 = sand.u32 %s80, 1
        %s1778 = scalar_lea.sflag [#allocation4], %s1777
        %s1779 = sand.u32 %s80, 1
        %s1780 = smul.addr %s1779, 128
        %s1781 = scalar_lea.vmem [#allocation7], %s1780
        %s1782 = sand.u32 %s106, 1
        %s1783 = scalar_lea.sflag [#allocation9], %s1782
        %s1784 = sand.u32 %s106, 1
        %s1785 = smul.addr %s1784, 2
        %s1786 = scalar_lea.vmem [#allocation8], %s1785
        // Predicated region
        $region37: #{tpu_custom_call.1} parent=27 // pred_check
          %p1787 = pneg %p90
        $region38: #{tpu_custom_call.1} parent=27 // pred_check_branch
          %1789 = sbr.rel (%p1787) target = $region40
        $region39: #{tpu_custom_call.1} parent=27 // pred_region
          %1791 = vsyncadd %s1778, 0
          %s1792 = smul.addr %s25, 32
          %s1793 = smul.addr %s1792, 4
          %s1794 = scalar_lea.hbm %s2, %s1793
          %s1795 = sshll.u32 %s1781, 4
          %s1796 = int_to_ptr.vmem [resolvable:$true] %s1795
          %s1797 = sshll.u32 %s1794, 4
          %s1798 = int_to_ptr.hbm [resolvable:$true] %s1797
          %1803 = dma.vmem_to_hbm [thread:$0]  %s1796, 2048, %s1798, %s1778, 64, 64, 4
        $region40: #{tpu_custom_call.1} parent=27 // pred_fallthru
          _
        // Predicated region
        $region41: #{tpu_custom_call.1} parent=27 // pred_check
          %p1804 = pneg %p116
        $region42: #{tpu_custom_call.1} parent=27 // pred_check_branch
          %1806 = sbr.rel (%p1804) target = $region44
        $region43: #{tpu_custom_call.1} parent=27 // pred_region
          %1808 = vsyncadd %s1783, 0
          %s1809 = smul.addr %s25, 2
          %s1810 = scalar_lea.hbm %s3, %s1809
          %s1812 = sshll.u32 %s1786, 4
          %s1813 = int_to_ptr.vmem [resolvable:$true] %s1812
          %s1814 = sshll.u32 %s1810, 4
          %s1815 = int_to_ptr.hbm [resolvable:$true] %s1814
          %1817 = dma.vmem_to_hbm [thread:$0]  %s1813, 32, %s1815, %s1783
        $region44: #{tpu_custom_call.1} parent=27 // pred_fallthru
          _
      $region28: #{tpu_custom_call.1} parent=5 // pred_fallthru
        _
      %p1818 = scmp.le.s32.totalorder 2, %s20
      // Predicated region
      $region45: #{tpu_custom_call.1} parent=5 // pred_check
        %p1819 = pneg %p1818
      $region46: #{tpu_custom_call.1} parent=5 // pred_check_branch
        %1821 = sbr.rel (%p1819) target = $region48
      $region47: #{tpu_custom_call.1} parent=5 // pred_region
        %s1822 = ssub.s32 %s20, 2
        // Predicated region
        $region49: #{tpu_custom_call.1} parent=47 // pred_check
          %p1823 = pneg %p96
        $region50: #{tpu_custom_call.1} parent=47 // pred_check_branch
          %1825 = sbr.rel (%p1823) target = $region52
        $region51: #{tpu_custom_call.1} parent=47 // pred_region
          %s1826 = sand.u32 %s81, 1
          %s1827 = scalar_lea.sflag [#allocation4], %s1826
          %s1828 = sand.u32 %s81, 1
          %s1829 = smul.addr %s1828, 128
          %s1830 = scalar_lea.vmem [#allocation7], %s1829
          %1832 = dma.done %s1827, 2048
        $region52: #{tpu_custom_call.1} parent=47 // pred_fallthru
          _
        // Predicated region
        $region53: #{tpu_custom_call.1} parent=47 // pred_check
          %p1833 = pneg %p122
        $region54: #{tpu_custom_call.1} parent=47 // pred_check_branch
          %1835 = sbr.rel (%p1833) target = $region56
        $region55: #{tpu_custom_call.1} parent=47 // pred_region
          %s1836 = sand.u32 %s107, 1
          %s1837 = scalar_lea.sflag [#allocation9], %s1836
          %s1838 = sand.u32 %s107, 1
          %s1839 = smul.addr %s1838, 2
          %s1840 = scalar_lea.vmem [#allocation8], %s1839
          %1842 = dma.done %s1837, 32
        $region56: #{tpu_custom_call.1} parent=47 // pred_fallthru
          _
      $region48: #{tpu_custom_call.1} parent=5 // pred_fallthru
        _
    $region6: #{tpu_custom_call.1} parent=1 // loop_footer
      %s24 = sadd.s32 1, %s20
    $region7: #{tpu_custom_call.1} parent=1 // loop_footer_branch
      %19 = sbr.rel target = $region3
    $region8: #{tpu_custom_call.1} parent=1 // loop_exit
      _
    %1843 = vsyncpa [#allocation3], 1
    %s1844 = scalar_lea.sflag [#allocation3], 1
    %1845 = vsyncpa %s1844, 1
    %1846 = vsyncpa [#allocation6], 1
    %1847 = vsyncpa [#allocation4], 1
    %s1848 = scalar_lea.sflag [#allocation4], 1
    %1849 = vsyncpa %s1848, 1
    %1850 = vsyncpa [#allocation9], 1
    %s1851 = scalar_lea.sflag [#allocation9], 1
    %1852 = vsyncpa %s1851, 1

</llo_original>
